<compile_context>
chip_gen: v7x
topology: tpu7x:2x2x1
jax: 0.10.0
libtpu: 0.0.40
codegen_flags: <defaults>
</compile_context>

<pallas_src>
import functools
import math

import jax
import jax.numpy as jnp
from jax.experimental import pallas as pl
from jax.experimental.pallas import tpu as pltpu


def _round_up(x, m):
    return (x + m - 1) // m * m


# -----------------------------------------------------------------------------
# Pallas kernel: GRU recurrence only (gx precomputed and streamed from HBM).
# -----------------------------------------------------------------------------
def gru_rec_kernel(*refs, num_dir, t_total, t_chunk):
    """grid = (nB, nT); batch-block axis 'parallel', time-chunk axis 'arbitrary'.

    Per direction d the inputs are:
      gx   : (t_chunk, B_blk, 3*H_pad) f32   x @ W_ih + (b_ih with r/z b_hh folded)
      whh  : (H_pad, 3*H_pad)          bf16
      bhh_n: (1, H_pad)                f32   only the n-gate b_hh stays un-folded
      h0   : (B_blk, H_pad)            f32
    then per direction one output (t_chunk, B_blk, H_pad) f32 and one VMEM
    scratch (B_blk, H_pad) f32 carrying the hidden state across time chunks.
    Direction 0 walks time forward, direction 1 backward (chunk order and
    within-chunk order both reversed purely via index arithmetic).
    """
    in_refs = refs[:4 * num_dir]
    out_refs = refs[4 * num_dir:5 * num_dir]
    scr_refs = refs[5 * num_dir:6 * num_dir]

    c = pl.program_id(1)
    n_c = pl.num_programs(1)
    hdim = out_refs[0].shape[-1]              # H_pad (multiple of 128, lane dense)
    need_mask = (t_total % t_chunk) != 0      # static python bool

    # Re-initialize the carried hidden states at the first chunk.
    @pl.when(c == 0)
    def _():
        for d in range(num_dir):
            scr_refs[d][...] = in_refs[4 * d + 3][...]

    gx_refs = [in_refs[4 * d + 0] for d in range(num_dir)]
    whh = [in_refs[4 * d + 1][...] for d in range(num_dir)]       # hoisted loads
    bhn = [in_refs[4 * d + 2][...] for d in range(num_dir)]

    def sigm(x):
        # sigmoid(x) == 0.5 * tanh(0.5 * x) + 0.5 -> single EUP op on the chain.
        return 0.5 * jnp.tanh(0.5 * x) + 0.5

    def body(t, hs):
        new_hs = []
        for d in range(num_dir):
            tt = t if d == 0 else t_chunk - 1 - t      # backward: reversed in-chunk
            h = hs[d]
            gx = gx_refs[d][tt]                        # (B_blk, 3*H_pad)
            gh = jnp.dot(h.astype(jnp.bfloat16), whh[d],
                         preferred_element_type=jnp.float32)
            r = sigm(gx[:, 0:hdim] + gh[:, 0:hdim])
            z = sigm(gx[:, hdim:2 * hdim] + gh[:, hdim:2 * hdim])
            n = jnp.tanh(gx[:, 2 * hdim:3 * hdim]
                         + r * (gh[:, 2 * hdim:3 * hdim] + bhn[d]))
            h_new = n + z * (h - n)                    # == (1-z)*n + z*h
            if need_mask:
                tb = c if d == 0 else n_c - 1 - c      # forward-time block index
                valid = (tb * t_chunk + tt) < t_total
                h_new = jnp.where(valid, h_new, h)     # freeze on padded timesteps
            out_refs[d][tt] = h_new
            new_hs.append(h_new)
        return tuple(new_hs)

    hs0 = tuple(scr_refs[d][...] for d in range(num_dir))
    hs_fin = jax.lax.fori_loop(0, t_chunk, body, hs0, unroll=min(4, t_chunk))
    for d in range(num_dir):
        scr_refs[d][...] = hs_fin[d]


# -----------------------------------------------------------------------------
# Hardware-aware sizing helpers.
# -----------------------------------------------------------------------------
def _vmem_capacity_bytes():
    try:
        return int(pltpu.get_tpu_info().vmem_capacity_bytes)
    except Exception:
        return 64 * 1024 * 1024        # conservative (v7x per-TC VMEM)


def _num_tensorcores_per_chip():
    try:
        kind = jax.devices()[0].device_kind.lower()
    except Exception:
        return 1
    return 2 if ("v7" in kind or "v4" in kind) else 1


def _vmem_estimate(t_chunk, b_blk, h_pad, num_dir):
    g3 = 3 * h_pad
    per_dir = (2 * t_chunk * b_blk * g3 * 4        # gx blocks (double buffered)
               + 2 * t_chunk * b_blk * h_pad * 4   # out blocks (double buffered)
               + 2 * h_pad * g3 * 2                # whh bf16
               + 2 * b_blk * h_pad * 4             # h0
               + 2 * h_pad * 4                     # bhh_n
               + b_blk * h_pad * 4)                # hidden-carry scratch
    return num_dir * per_dir + (1 << 20)           # slack for internal scratch


def _pick_t_chunk(T, b_blk, h_pad, num_dir, budget):
    for tc in (128, 96, 64, 48, 32, 24, 16, 8):
        if _vmem_estimate(tc, b_blk, h_pad, num_dir) <= budget:
            return max(1, min(tc, T))
    return max(1, min(8, T))


# -----------------------------------------------------------------------------
# Layer recurrence wrapper: one pallas_call drives both directions.
# -----------------------------------------------------------------------------
def gru_recurrence(gx_list, whh_list, bhn_list, h0_list, *, t_total, t_chunk, n_b):
    num_dir = len(gx_list)
    T_pad, B_pad, G3 = gx_list[0].shape
    H_pad = G3 // 3
    nT = T_pad // t_chunk
    B_blk = B_pad // n_b

    def fwd_t(b, c):
        return (c, b, 0)

    def bwd_t(b, c):
        return (nT - 1 - c, b, 0)

    def whole(b, c):
        return (0, 0)

    def b_only(b, c):
        return (b, 0)

    in_specs, inputs = [], []
    for d in range(num_dir):
        t_map = fwd_t if d == 0 else bwd_t
        in_specs += [pl.BlockSpec((t_chunk, B_blk, G3), t_map),
                     pl.BlockSpec((H_pad, G3), whole),
                     pl.BlockSpec((1, H_pad), whole),
                     pl.BlockSpec((B_blk, H_pad), b_only)]
        inputs += [gx_list[d], whh_list[d], bhn_list[d], h0_list[d]]

    out_specs = [pl.BlockSpec((t_chunk, B_blk, H_pad), fwd_t if d == 0 else bwd_t)
                 for d in range(num_dir)]
    out_shape = tuple(jax.ShapeDtypeStruct((T_pad, B_pad, H_pad), jnp.float32)
                      for _ in range(num_dir))
    scratch = [pltpu.VMEM((B_blk, H_pad), jnp.float32) for _ in range(num_dir)]

    vmem_cap = _vmem_capacity_bytes()
    vmem_est = _vmem_estimate(t_chunk, B_blk, H_pad, num_dir)
    # Always set the scoped limit (v5e default is only 16 MiB); never exceed the
    # physical per-TC capacity minus headroom (64 MiB on v7x).
    vmem_limit = int(min(max(2 * vmem_est, 24 * 1024 * 1024),
                         vmem_cap - 8 * 1024 * 1024))

    flops = int(num_dir * T_pad * 2 * B_pad * H_pad * G3)
    trans = int(num_dir * T_pad * B_pad * G3)
    bytes_acc = int(sum(int(a.size) * a.dtype.itemsize for a in inputs)
                    + num_dir * T_pad * B_pad * H_pad * 4)

    outs = pl.pallas_call(
        functools.partial(gru_rec_kernel, num_dir=num_dir,
                          t_total=t_total, t_chunk=t_chunk),
        out_shape=out_shape,
        grid_spec=pltpu.PrefetchScalarGridSpec(
            num_scalar_prefetch=0,
            grid=(n_b, nT),
            in_specs=in_specs,
            out_specs=out_specs,
            scratch_shapes=scratch),
        compiler_params=pltpu.CompilerParams(
            dimension_semantics=("parallel", "arbitrary"),
            vmem_limit_bytes=vmem_limit),
        cost_estimate=pl.CostEstimate(flops=flops, transcendentals=trans,
                                      bytes_accessed=bytes_acc),
    )(*inputs)
    return outs if isinstance(outs, (list, tuple)) else (outs,)


# -----------------------------------------------------------------------------
# Parameter construction helpers (done once, MXU-ready).
# -----------------------------------------------------------------------------
def _pad_gate_weight_t(w, d_rows, h, h_pad):
    """torch-layout (3H, D_in) -> (d_rows, 3*H_pad) transposed, per-gate
    zero-padded, bf16."""
    d_in = w.shape[1]
    wt = jnp.transpose(w).reshape(d_in, 3, h)
    out = jnp.zeros((d_rows, 3, h_pad), jnp.float32).at[:d_in, :, :h].set(wt)
    return out.reshape(d_rows, 3 * h_pad).astype(jnp.bfloat16)


class EncoderRNNPallas:

    def __init__(self, input_size, num_units, nlayers, concat, bidir, dropout,
                 return_last, key, t_chunk=None):
        self.input_size = input_size
        self.num_units = num_units
        self.nlayers = nlayers
        self.concat = concat
        self.bidir = bidir
        self.dropout = dropout          # eval mode -> LockedDropout is identity
        self.return_last = return_last
        self.t_chunk = t_chunk          # None -> auto from VMEM budget and T
        self.num_dir = 2 if bidir else 1

        H = num_units
        H_pad = _round_up(H, 128)
        self.H_pad = H_pad
        bias_k = 1.0 / math.sqrt(H)
        tags = ('f', 'b') if bidir else ('f',)
        self.tags = tags

        self.layer_params = []
        for i in range(nlayers):
            in_size = input_size if i == 0 else num_units * self.num_dir
            raw = {}
            for tag in tags:
                key, k1, k2, k3, k4 = jax.random.split(key, 5)
                # Weights ~ N(0, 0.1) (reset_parameters style); biases kept
                # nonzero (torch default-init style) so the folding paths run.
                raw[f'w_ih_{tag}'] = 0.1 * jax.random.normal(
                    k1, (3 * H, in_size), jnp.float32)
                raw[f'w_hh_{tag}'] = 0.1 * jax.random.normal(
                    k2, (3 * H, H), jnp.float32)
                raw[f'b_ih_{tag}'] = jax.random.uniform(
                    k3, (3 * H,), jnp.float32, -bias_k, bias_k)
                raw[f'b_hh_{tag}'] = jax.random.uniform(
                    k4, (3 * H,), jnp.float32, -bias_k, bias_k)

            lp = {'raw': raw, 'wih_parts': {}, 'whh': {}, 'bias_gx': {},
                  'bhh_n': {}}
            for tag in tags:
                w_ih = raw[f'w_ih_{tag}']
                if i == 0:
                    # Layer 0: keep the true input width (projection runs
                    # outside the recurrence, so no 128-padding of K needed).
                    parts = [_pad_gate_weight_t(w_ih, in_size, H, H_pad)]
                else:
                    # Layers > 0 consume the previous layer's padded
                    # per-direction output blocks directly (no concat/re-pad).
                    parts = [_pad_gate_weight_t(w_ih[:, d * H:(d + 1) * H],
                                                H_pad, H, H_pad)
                             for d in range(self.num_dir)]
                lp['wih_parts'][tag] = parts
                lp['whh'][tag] = _pad_gate_weight_t(raw[f'w_hh_{tag}'],
                                                    H_pad, H, H_pad)
                b_ih = raw[f'b_ih_{tag}'].reshape(3, H)
                b_hh = raw[f'b_hh_{tag}'].reshape(3, H)
                # Fold b_hh of the r/z gates into the input-side bias; only the
                # n-gate b_hh must stay inside r * (gh_n + b_hh_n).
                folded = b_ih.at[0:2].add(b_hh[0:2])
                lp['bias_gx'][tag] = (jnp.zeros((3, H_pad), jnp.float32)
                                      .at[:, :H].set(folded)
                                      .reshape(1, 1, 3 * H_pad))
                lp['bhh_n'][tag] = (jnp.zeros((1, H_pad), jnp.float32)
                                    .at[0, :H].set(b_hh[2]))
            self.layer_params.append(lp)

        # init_hidden parameters are zero-initialized in the PyTorch module.
        self.init_hidden = [jnp.zeros((self.num_dir, 1, num_units), jnp.float32)
                            for _ in range(nlayers)]

    def get_init(self, bsz, i):
        return jnp.broadcast_to(self.init_hidden[i],
                                (self.num_dir, bsz, self.num_units))

    def forward(self, x):
        """x: (B, T, input_size) batch-first, like the PyTorch module (eval)."""
        B, T, D = x.shape
        H, H_pad, num_dir = self.num_units, self.H_pad, self.num_dir
        B_pad = _round_up(max(B, 16), 16)     # 16: bf16 sublane packing

        n_b = 2 if (_num_tensorcores_per_chip() >= 2 and B_pad % 32 == 0) else 1
        B_blk = B_pad // n_b
        budget = _vmem_capacity_bytes() - 16 * 1024 * 1024
        t_chunk = self.t_chunk or _pick_t_chunk(T, B_blk, H_pad, num_dir, budget)
        T_pad = _round_up(T, t_chunk)

        # Single transpose to time-major + single zero-pad at the encoder
        # input; everything between layers stays in the padded kernel layout.
        x_tm = jnp.transpose(x.astype(jnp.float32), (1, 0, 2))
        x_p = jnp.zeros((T_pad, B_pad, D), jnp.float32).at[:T, :B, :].set(x_tm)
        x_parts = [x_p]

        outputs = []
        for i in range(self.nlayers):
            lp = self.layer_params[i]
            # TODO(synk): LockedDropout training-mode mask not implemented.
            h0_full = self.get_init(B, i)
            h0_list = [jnp.zeros((B_pad, H_pad), jnp.float32)
                       .at[:B, :H].set(h0_full[d]) for d in range(num_dir)]

            # Input projection for the WHOLE layer as large dense matmuls
            # OUTSIDE the recurrence (keeps the MXU-heavy work off the serial
            # critical path); consumes the previous layer's padded blocks.
            gx_list = []
            for tag in self.tags:
                gx = lp['bias_gx'][tag]
                for xp, wp in zip(x_parts, lp['wih_parts'][tag]):
                    gx = gx + jnp.einsum('tbd,dg->tbg',
                                         xp.astype(jnp.bfloat16), wp,
                                         preferred_element_type=jnp.float32)
                gx_list.append(gx)

            outs = gru_recurrence(
                gx_list,
                [lp['whh'][tag] for tag in self.tags],
                [lp['bhh_n'][tag] for tag in self.tags],
                h0_list,
                t_total=T, t_chunk=t_chunk, n_b=n_b)
            x_parts = list(outs)    # feed next layer in padded layout (no concat)

            if self.return_last:
                hns = [outs[0][T - 1, :B, :H]]
                if self.bidir:
                    hns.append(outs[1][0, :B, :H])
                outputs.append(jnp.concatenate(hns, axis=-1)
                               if num_dir > 1 else hns[0])
            else:
                parts = [o[:T, :B, :H] for o in outs]
                outputs.append(parts[0] if num_dir == 1 else
                               jnp.concatenate(parts, axis=-1))

        if self.concat:
            res = jnp.concatenate(outputs,
                                  axis=-1 if self.return_last else 2)
        else:
            res = outputs[-1]
        if self.return_last:
            return res
        return jnp.transpose(res, (1, 0, 2))        # back to batch-first


# -----------------------------------------------------------------------------
# Pure-JAX reference (same bf16-matmul / f32-accumulate math as the kernel).
# -----------------------------------------------------------------------------
def _gru_dir_ref(x_tm, w_ih, w_hh, b_ih, b_hh, h0):
    H = h0.shape[1]
    wih_t = jnp.transpose(w_ih).astype(jnp.bfloat16)
    whh_t = jnp.transpose(w_hh).astype(jnp.bfloat16)

    def step(h, x_t):
        gx = jnp.dot(x_t.astype(jnp.bfloat16), wih_t,
                     preferred_element_type=jnp.float32) + b_ih
        gh = jnp.dot(h.astype(jnp.bfloat16), whh_t,
                     preferred_element_type=jnp.float32) + b_hh
        r = jax.nn.sigmoid(gx[:, :H] + gh[:, :H])
        z = jax.nn.sigmoid(gx[:, H:2 * H] + gh[:, H:2 * H])
        n = jnp.tanh(gx[:, 2 * H:] + r * gh[:, 2 * H:])
        h_new = (1.0 - z) * n + z * h
        return h_new, h_new

    h_fin, outs = jax.lax.scan(step, h0, x_tm)
    return outs, h_fin


def encoder_ref(model, x):
    B = x.shape[0]
    out_tm = jnp.transpose(x.astype(jnp.float32), (1, 0, 2))
    outputs = []
    for i in range(model.nlayers):
        raw = model.layer_params[i]['raw']
        h0 = model.get_init(B, i)
        out_f, hn_f = _gru_dir_ref(out_tm, raw['w_ih_f'], raw['w_hh_f'],
                                   raw['b_ih_f'], raw['b_hh_f'], h0[0])
        if model.bidir:
            out_b_rev, hn_b = _gru_dir_ref(out_tm[::-1], raw['w_ih_b'],
                                           raw['w_hh_b'], raw['b_ih_b'],
                                           raw['b_hh_b'], h0[1])
            out_tm = jnp.concatenate([out_f, out_b_rev[::-1]], axis=-1)
            h_n = jnp.stack([hn_f, hn_b], axis=0)
        else:
            out_tm = out_f
            h_n = hn_f[None]
        if model.return_last:
            outputs.append(jnp.transpose(h_n, (1, 0, 2)).reshape(B, -1))
        else:
            outputs.append(out_tm)
    if model.concat:
        res = jnp.concatenate(outputs, axis=-1 if model.return_last else 2)
    else:
        res = outputs[-1]
    if model.return_last:
        return res
    return jnp.transpose(res, (1, 0, 2))


if __name__ == "__main__":
    key = jax.random.PRNGKey(0)

    # --- config 1: bidirectional, 2 layers, concat over layers ---------------
    # t_chunk=3 deliberately does NOT divide T so the multi-chunk hidden carry,
    # the in-kernel backward reversal AND the padded-timestep masking all run.
    key, kx1, kp1 = jax.random.split(key, 3)
    B, T, D_IN, H, NLAYERS = 2, 8, 16, 32, 2
    x1 = jax.random.normal(kx1, (B, T, D_IN), jnp.float32)
    m1 = EncoderRNNPallas(input_size=D_IN, num_units=H, nlayers=NLAYERS,
                          concat=True, bidir=True, dropout=0.2,
                          return_last=False, key=kp1, t_chunk=3)
    out1 = jax.block_until_ready(m1.forward(x1))
    assert out1.shape == (B, T, 2 * H * NLAYERS), out1.shape
    ref1 = jax.block_until_ready(encoder_ref(m1, x1))
    err1 = float(jnp.max(jnp.abs(out1 - ref1)))
    assert jnp.allclose(out1, ref1, atol=5e-3, rtol=5e-3), err1

    # --- config 2: unidirectional, return_last, auto t_chunk -----------------
    key, kx2, kp2 = jax.random.split(key, 3)
    B2, T2 = 2, 5
    x2 = jax.random.normal(kx2, (B2, T2, D_IN), jnp.float32)
    m2 = EncoderRNNPallas(input_size=D_IN, num_units=H, nlayers=2,
                          concat=False, bidir=False, dropout=0.0,
                          return_last=True, key=kp2)
    out2 = jax.block_until_ready(m2.forward(x2))
    assert out2.shape == (B2, H), out2.shape
    ref2 = jax.block_until_ready(encoder_ref(m2, x2))
    err2 = float(jnp.max(jnp.abs(out2 - ref2)))
    assert jnp.allclose(out2, ref2, atol=5e-3, rtol=5e-3), err2

    print("KERNEL_OK")
</pallas_src>

<mosaic_0001>
module attributes {stable_mosaic.version = 11 : i64} {
  func.func @gru_rec_kernel(%arg0: i32, %arg1: i32, %arg2: memref<3x16x384xf32, #tpu.memory_space<vmem>>, %arg3: memref<128x384xbf16, #tpu.memory_space<vmem>>, %arg4: memref<1x128xf32, #tpu.memory_space<vmem>>, %arg5: memref<16x128xf32, #tpu.memory_space<vmem>>, %arg6: memref<3x16x384xf32, #tpu.memory_space<vmem>>, %arg7: memref<128x384xbf16, #tpu.memory_space<vmem>>, %arg8: memref<1x128xf32, #tpu.memory_space<vmem>>, %arg9: memref<16x128xf32, #tpu.memory_space<vmem>>, %arg10: memref<3x16x128xf32, #tpu.memory_space<vmem>>, %arg11: memref<3x16x128xf32, #tpu.memory_space<vmem>>, %arg12: memref<16x128xf32, #tpu.memory_space<vmem>>, %arg13: memref<16x128xf32, #tpu.memory_space<vmem>>) attributes {dimension_semantics = [#tpu.dimension_semantics<parallel>, #tpu.dimension_semantics<arbitrary>], iteration_bounds = array<i64: 1, 3>, scalar_prefetch = 0 : i64, scratch_operands = 2 : i64, tpu.core_type = #tpu.core_type<tc>, window_params = [{transform_indices = @transform_0, window_bounds = array<i64: 3, 16, 384>}, {pipeline_mode = #tpu.pipeline_mode<synchronous>, transform_indices = @transform_1, window_bounds = array<i64: 128, 384>}, {pipeline_mode = #tpu.pipeline_mode<synchronous>, transform_indices = @transform_2, window_bounds = array<i64: 1, 128>}, {transform_indices = @transform_3, window_bounds = array<i64: 16, 128>}, {transform_indices = @transform_4, window_bounds = array<i64: 3, 16, 384>}, {pipeline_mode = #tpu.pipeline_mode<synchronous>, transform_indices = @transform_5, window_bounds = array<i64: 128, 384>}, {pipeline_mode = #tpu.pipeline_mode<synchronous>, transform_indices = @transform_6, window_bounds = array<i64: 1, 128>}, {transform_indices = @transform_7, window_bounds = array<i64: 16, 128>}, {transform_indices = @transform_8, window_bounds = array<i64: 3, 16, 128>}, {transform_indices = @transform_9, window_bounds = array<i64: 3, 16, 128>}]} {
    %c0_i32 = arith.constant 0 : i32
    %0 = arith.cmpi eq, %arg1, %c0_i32 : i32
    %1 = arith.extui %0 : i1 to i32
    %c0_i32_0 = arith.constant 0 : i32
    %2 = arith.cmpi ne, %1, %c0_i32_0 : i32
    scf.if %2 {
      %c0_99 = arith.constant 0 : index
      %c0_100 = arith.constant 0 : index
      %275 = vector.load %arg5[%c0_99, %c0_100] : memref<16x128xf32, #tpu.memory_space<vmem>>, vector<16x128xf32>
      %c0_101 = arith.constant 0 : index
      %c0_102 = arith.constant 0 : index
      %276 = vector.load %arg12[%c0_101, %c0_102] : memref<16x128xf32, #tpu.memory_space<vmem>>, vector<16x128xf32>
      tpu.vector_store %arg12[%c0_101, %c0_102], %275 {strides = array<i32>} : memref<16x128xf32, #tpu.memory_space<vmem>>, vector<16x128xf32>,
      %c0_103 = arith.constant 0 : index
      %c0_104 = arith.constant 0 : index
      %277 = vector.load %arg9[%c0_103, %c0_104] : memref<16x128xf32, #tpu.memory_space<vmem>>, vector<16x128xf32>
      %c0_105 = arith.constant 0 : index
      %c0_106 = arith.constant 0 : index
      %278 = vector.load %arg13[%c0_105, %c0_106] : memref<16x128xf32, #tpu.memory_space<vmem>>, vector<16x128xf32>
      tpu.vector_store %arg13[%c0_105, %c0_106], %277 {strides = array<i32>} : memref<16x128xf32, #tpu.memory_space<vmem>>, vector<16x128xf32>,
    } else {
    }
    %c0 = arith.constant 0 : index
    %c0_1 = arith.constant 0 : index
    %3 = vector.load %arg3[%c0, %c0_1] : memref<128x384xbf16, #tpu.memory_space<vmem>>, vector<128x384xbf16>
    %c0_2 = arith.constant 0 : index
    %c0_3 = arith.constant 0 : index
    %4 = vector.load %arg7[%c0_2, %c0_3] : memref<128x384xbf16, #tpu.memory_space<vmem>>, vector<128x384xbf16>
    %c0_4 = arith.constant 0 : index
    %c0_5 = arith.constant 0 : index
    %5 = vector.load %arg4[%c0_4, %c0_5] : memref<1x128xf32, #tpu.memory_space<vmem>>, vector<1x128xf32>
    %c0_6 = arith.constant 0 : index
    %c0_7 = arith.constant 0 : index
    %6 = vector.load %arg8[%c0_6, %c0_7] : memref<1x128xf32, #tpu.memory_space<vmem>>, vector<1x128xf32>
    %c0_8 = arith.constant 0 : index
    %c0_9 = arith.constant 0 : index
    %7 = vector.load %arg12[%c0_8, %c0_9] : memref<16x128xf32, #tpu.memory_space<vmem>>, vector<16x128xf32>
    %c0_10 = arith.constant 0 : index
    %c0_11 = arith.constant 0 : index
    %8 = vector.load %arg13[%c0_10, %c0_11] : memref<16x128xf32, #tpu.memory_space<vmem>>, vector<16x128xf32>
    %c0_i32_12 = arith.constant 0 : i32
    %9 = arith.index_cast %c0_i32_12 : i32 to index
    %c0_13 = arith.constant 0 : index
    %c0_14 = arith.constant 0 : index
    %10 = vector.load %arg2[%9, %c0_13, %c0_14] : memref<3x16x384xf32, #tpu.memory_space<vmem>>, vector<1x16x384xf32>
    %11 = vector.shape_cast %10 : vector<1x16x384xf32> to vector<16x384xf32>
    %12 = arith.truncf %7 : vector<16x128xf32> to vector<16x128xbf16>
    %cst = arith.constant dense<0.000000e+00> : vector<16x384xf32>
    %13 = tpu.matmul %12, %3, %cst {dimension_numbers = #tpu.dot_dimension_numbers<[1], [0], [0], [1], [0, 0, 1, 1], [], []>} : vector<16x128xbf16>, vector<128x384xbf16>, vector<16x384xf32> -> vector<16x384xf32>
    %14 = vector.extract_strided_slice %11 {offsets = [0, 0], sizes = [16, 128], strides = [1, 1]} : vector<16x384xf32> to vector<16x128xf32>
    %15 = vector.extract_strided_slice %13 {offsets = [0, 0], sizes = [16, 128], strides = [1, 1]} : vector<16x384xf32> to vector<16x128xf32>
    %16 = arith.addf %14, %15 : vector<16x128xf32>
    %cst_15 = arith.constant 5.000000e-01 : f32
    %17 = vector.broadcast %cst_15 : f32 to vector<16x128xf32>
    %18 = arith.mulf %17, %16 : vector<16x128xf32>
    %19 = math.tanh %18 : vector<16x128xf32>
    %cst_16 = arith.constant 5.000000e-01 : f32
    %20 = vector.broadcast %cst_16 : f32 to vector<16x128xf32>
    %21 = arith.mulf %20, %19 : vector<16x128xf32>
    %cst_17 = arith.constant 5.000000e-01 : f32
    %22 = vector.broadcast %cst_17 : f32 to vector<16x128xf32>
    %23 = arith.addf %21, %22 : vector<16x128xf32>
    %24 = vector.extract_strided_slice %11 {offsets = [0, 128], sizes = [16, 128], strides = [1, 1]} : vector<16x384xf32> to vector<16x128xf32>
    %25 = vector.extract_strided_slice %13 {offsets = [0, 128], sizes = [16, 128], strides = [1, 1]} : vector<16x384xf32> to vector<16x128xf32>
    %26 = arith.addf %24, %25 : vector<16x128xf32>
    %cst_18 = arith.constant 5.000000e-01 : f32
    %27 = vector.broadcast %cst_18 : f32 to vector<16x128xf32>
    %28 = arith.mulf %27, %26 : vector<16x128xf32>
    %29 = math.tanh %28 : vector<16x128xf32>
    %cst_19 = arith.constant 5.000000e-01 : f32
    %30 = vector.broadcast %cst_19 : f32 to vector<16x128xf32>
    %31 = arith.mulf %30, %29 : vector<16x128xf32>
    %cst_20 = arith.constant 5.000000e-01 : f32
    %32 = vector.broadcast %cst_20 : f32 to vector<16x128xf32>
    %33 = arith.addf %31, %32 : vector<16x128xf32>
    %34 = vector.extract_strided_slice %11 {offsets = [0, 256], sizes = [16, 128], strides = [1, 1]} : vector<16x384xf32> to vector<16x128xf32>
    %35 = vector.extract_strided_slice %13 {offsets = [0, 256], sizes = [16, 128], strides = [1, 1]} : vector<16x384xf32> to vector<16x128xf32>
    %36 = vector.broadcast %5 : vector<1x128xf32> to vector<16x128xf32>
    %37 = arith.addf %35, %36 : vector<16x128xf32>
    %38 = arith.mulf %23, %37 : vector<16x128xf32>
    %39 = arith.addf %34, %38 : vector<16x128xf32>
    %40 = math.tanh %39 : vector<16x128xf32>
    %41 = arith.subf %7, %40 : vector<16x128xf32>
    %42 = arith.mulf %33, %41 : vector<16x128xf32>
    %43 = arith.addf %40, %42 : vector<16x128xf32>
    %c3_i32 = arith.constant 3 : i32
    %44 = arith.muli %arg1, %c3_i32 : i32
    %45 = arith.addi %44, %c0_i32_12 : i32
    %c8_i32 = arith.constant 8 : i32
    %46 = arith.cmpi slt, %45, %c8_i32 : i32
    %47 = arith.select %46, %43, %7 : vector<16x128xf32>
    %48 = arith.index_cast %c0_i32_12 : i32 to index
    %c0_21 = arith.constant 0 : index
    %c0_22 = arith.constant 0 : index
    %49 = vector.load %arg10[%48, %c0_21, %c0_22] : memref<3x16x128xf32, #tpu.memory_space<vmem>>, vector<1x16x128xf32>
    %50 = vector.shape_cast %49 : vector<1x16x128xf32> to vector<16x128xf32>
    %51 = vector.shape_cast %47 : vector<16x128xf32> to vector<1x16x128xf32>
    tpu.vector_store %arg10[%48, %c0_21, %c0_22], %51 {strides = array<i32>} : memref<3x16x128xf32, #tpu.memory_space<vmem>>, vector<1x16x128xf32>,
    %c2_i32 = arith.constant 2 : i32
    %52 = arith.subi %c2_i32, %c0_i32_12 : i32
    %53 = arith.index_cast %52 : i32 to index
    %c0_23 = arith.constant 0 : index
    %c0_24 = arith.constant 0 : index
    %54 = vector.load %arg6[%53, %c0_23, %c0_24] : memref<3x16x384xf32, #tpu.memory_space<vmem>>, vector<1x16x384xf32>
    %55 = vector.shape_cast %54 : vector<1x16x384xf32> to vector<16x384xf32>
    %56 = arith.truncf %8 : vector<16x128xf32> to vector<16x128xbf16>
    %cst_25 = arith.constant dense<0.000000e+00> : vector<16x384xf32>
    %57 = tpu.matmul %56, %4, %cst_25 {dimension_numbers = #tpu.dot_dimension_numbers<[1], [0], [0], [1], [0, 0, 1, 1], [], []>} : vector<16x128xbf16>, vector<128x384xbf16>, vector<16x384xf32> -> vector<16x384xf32>
    %58 = vector.extract_strided_slice %55 {offsets = [0, 0], sizes = [16, 128], strides = [1, 1]} : vector<16x384xf32> to vector<16x128xf32>
    %59 = vector.extract_strided_slice %57 {offsets = [0, 0], sizes = [16, 128], strides = [1, 1]} : vector<16x384xf32> to vector<16x128xf32>
    %60 = arith.addf %58, %59 : vector<16x128xf32>
    %cst_26 = arith.constant 5.000000e-01 : f32
    %61 = vector.broadcast %cst_26 : f32 to vector<16x128xf32>
    %62 = arith.mulf %61, %60 : vector<16x128xf32>
    %63 = math.tanh %62 : vector<16x128xf32>
    %cst_27 = arith.constant 5.000000e-01 : f32
    %64 = vector.broadcast %cst_27 : f32 to vector<16x128xf32>
    %65 = arith.mulf %64, %63 : vector<16x128xf32>
    %cst_28 = arith.constant 5.000000e-01 : f32
    %66 = vector.broadcast %cst_28 : f32 to vector<16x128xf32>
    %67 = arith.addf %65, %66 : vector<16x128xf32>
    %68 = vector.extract_strided_slice %55 {offsets = [0, 128], sizes = [16, 128], strides = [1, 1]} : vector<16x384xf32> to vector<16x128xf32>
    %69 = vector.extract_strided_slice %57 {offsets = [0, 128], sizes = [16, 128], strides = [1, 1]} : vector<16x384xf32> to vector<16x128xf32>
    %70 = arith.addf %68, %69 : vector<16x128xf32>
    %cst_29 = arith.constant 5.000000e-01 : f32
    %71 = vector.broadcast %cst_29 : f32 to vector<16x128xf32>
    %72 = arith.mulf %71, %70 : vector<16x128xf32>
    %73 = math.tanh %72 : vector<16x128xf32>
    %cst_30 = arith.constant 5.000000e-01 : f32
    %74 = vector.broadcast %cst_30 : f32 to vector<16x128xf32>
    %75 = arith.mulf %74, %73 : vector<16x128xf32>
    %cst_31 = arith.constant 5.000000e-01 : f32
    %76 = vector.broadcast %cst_31 : f32 to vector<16x128xf32>
    %77 = arith.addf %75, %76 : vector<16x128xf32>
    %78 = vector.extract_strided_slice %55 {offsets = [0, 256], sizes = [16, 128], strides = [1, 1]} : vector<16x384xf32> to vector<16x128xf32>
    %79 = vector.extract_strided_slice %57 {offsets = [0, 256], sizes = [16, 128], strides = [1, 1]} : vector<16x384xf32> to vector<16x128xf32>
    %80 = vector.broadcast %6 : vector<1x128xf32> to vector<16x128xf32>
    %81 = arith.addf %79, %80 : vector<16x128xf32>
    %82 = arith.mulf %67, %81 : vector<16x128xf32>
    %83 = arith.addf %78, %82 : vector<16x128xf32>
    %84 = math.tanh %83 : vector<16x128xf32>
    %85 = arith.subf %8, %84 : vector<16x128xf32>
    %86 = arith.mulf %77, %85 : vector<16x128xf32>
    %87 = arith.addf %84, %86 : vector<16x128xf32>
    %c2_i32_32 = arith.constant 2 : i32
    %88 = arith.subi %c2_i32_32, %arg1 : i32
    %c3_i32_33 = arith.constant 3 : i32
    %89 = arith.muli %88, %c3_i32_33 : i32
    %90 = arith.addi %89, %52 : i32
    %c8_i32_34 = arith.constant 8 : i32
    %91 = arith.cmpi slt, %90, %c8_i32_34 : i32
    %92 = arith.select %91, %87, %8 : vector<16x128xf32>
    %93 = arith.index_cast %52 : i32 to index
    %c0_35 = arith.constant 0 : index
    %c0_36 = arith.constant 0 : index
    %94 = vector.load %arg11[%93, %c0_35, %c0_36] : memref<3x16x128xf32, #tpu.memory_space<vmem>>, vector<1x16x128xf32>
    %95 = vector.shape_cast %94 : vector<1x16x128xf32> to vector<16x128xf32>
    %96 = vector.shape_cast %92 : vector<16x128xf32> to vector<1x16x128xf32>
    tpu.vector_store %arg11[%93, %c0_35, %c0_36], %96 {strides = array<i32>} : memref<3x16x128xf32, #tpu.memory_space<vmem>>, vector<1x16x128xf32>,
    %c1_i32 = arith.constant 1 : i32
    %97 = arith.index_cast %c1_i32 : i32 to index
    %c0_37 = arith.constant 0 : index
    %c0_38 = arith.constant 0 : index
    %98 = vector.load %arg2[%97, %c0_37, %c0_38] : memref<3x16x384xf32, #tpu.memory_space<vmem>>, vector<1x16x384xf32>
    %99 = vector.shape_cast %98 : vector<1x16x384xf32> to vector<16x384xf32>
    %100 = arith.truncf %47 : vector<16x128xf32> to vector<16x128xbf16>
    %cst_39 = arith.constant dense<0.000000e+00> : vector<16x384xf32>
    %101 = tpu.matmul %100, %3, %cst_39 {dimension_numbers = #tpu.dot_dimension_numbers<[1], [0], [0], [1], [0, 0, 1, 1], [], []>} : vector<16x128xbf16>, vector<128x384xbf16>, vector<16x384xf32> -> vector<16x384xf32>
    %102 = vector.extract_strided_slice %99 {offsets = [0, 0], sizes = [16, 128], strides = [1, 1]} : vector<16x384xf32> to vector<16x128xf32>
    %103 = vector.extract_strided_slice %101 {offsets = [0, 0], sizes = [16, 128], strides = [1, 1]} : vector<16x384xf32> to vector<16x128xf32>
    %104 = arith.addf %102, %103 : vector<16x128xf32>
    %cst_40 = arith.constant 5.000000e-01 : f32
    %105 = vector.broadcast %cst_40 : f32 to vector<16x128xf32>
    %106 = arith.mulf %105, %104 : vector<16x128xf32>
    %107 = math.tanh %106 : vector<16x128xf32>
    %cst_41 = arith.constant 5.000000e-01 : f32
    %108 = vector.broadcast %cst_41 : f32 to vector<16x128xf32>
    %109 = arith.mulf %108, %107 : vector<16x128xf32>
    %cst_42 = arith.constant 5.000000e-01 : f32
    %110 = vector.broadcast %cst_42 : f32 to vector<16x128xf32>
    %111 = arith.addf %109, %110 : vector<16x128xf32>
    %112 = vector.extract_strided_slice %99 {offsets = [0, 128], sizes = [16, 128], strides = [1, 1]} : vector<16x384xf32> to vector<16x128xf32>
    %113 = vector.extract_strided_slice %101 {offsets = [0, 128], sizes = [16, 128], strides = [1, 1]} : vector<16x384xf32> to vector<16x128xf32>
    %114 = arith.addf %112, %113 : vector<16x128xf32>
    %cst_43 = arith.constant 5.000000e-01 : f32
    %115 = vector.broadcast %cst_43 : f32 to vector<16x128xf32>
    %116 = arith.mulf %115, %114 : vector<16x128xf32>
    %117 = math.tanh %116 : vector<16x128xf32>
    %cst_44 = arith.constant 5.000000e-01 : f32
    %118 = vector.broadcast %cst_44 : f32 to vector<16x128xf32>
    %119 = arith.mulf %118, %117 : vector<16x128xf32>
    %cst_45 = arith.constant 5.000000e-01 : f32
    %120 = vector.broadcast %cst_45 : f32 to vector<16x128xf32>
    %121 = arith.addf %119, %120 : vector<16x128xf32>
    %122 = vector.extract_strided_slice %99 {offsets = [0, 256], sizes = [16, 128], strides = [1, 1]} : vector<16x384xf32> to vector<16x128xf32>
    %123 = vector.extract_strided_slice %101 {offsets = [0, 256], sizes = [16, 128], strides = [1, 1]} : vector<16x384xf32> to vector<16x128xf32>
    %124 = vector.broadcast %5 : vector<1x128xf32> to vector<16x128xf32>
    %125 = arith.addf %123, %124 : vector<16x128xf32>
    %126 = arith.mulf %111, %125 : vector<16x128xf32>
    %127 = arith.addf %122, %126 : vector<16x128xf32>
    %128 = math.tanh %127 : vector<16x128xf32>
    %129 = arith.subf %47, %128 : vector<16x128xf32>
    %130 = arith.mulf %121, %129 : vector<16x128xf32>
    %131 = arith.addf %128, %130 : vector<16x128xf32>
    %c3_i32_46 = arith.constant 3 : i32
    %132 = arith.muli %arg1, %c3_i32_46 : i32
    %133 = arith.addi %132, %c1_i32 : i32
    %c8_i32_47 = arith.constant 8 : i32
    %134 = arith.cmpi slt, %133, %c8_i32_47 : i32
    %135 = arith.select %134, %131, %47 : vector<16x128xf32>
    %136 = arith.index_cast %c1_i32 : i32 to index
    %c0_48 = arith.constant 0 : index
    %c0_49 = arith.constant 0 : index
    %137 = vector.load %arg10[%136, %c0_48, %c0_49] : memref<3x16x128xf32, #tpu.memory_space<vmem>>, vector<1x16x128xf32>
    %138 = vector.shape_cast %137 : vector<1x16x128xf32> to vector<16x128xf32>
    %139 = vector.shape_cast %135 : vector<16x128xf32> to vector<1x16x128xf32>
    tpu.vector_store %arg10[%136, %c0_48, %c0_49], %139 {strides = array<i32>} : memref<3x16x128xf32, #tpu.memory_space<vmem>>, vector<1x16x128xf32>,
    %c2_i32_50 = arith.constant 2 : i32
    %140 = arith.subi %c2_i32_50, %c1_i32 : i32
    %141 = arith.index_cast %140 : i32 to index
    %c0_51 = arith.constant 0 : index
    %c0_52 = arith.constant 0 : index
    %142 = vector.load %arg6[%141, %c0_51, %c0_52] : memref<3x16x384xf32, #tpu.memory_space<vmem>>, vector<1x16x384xf32>
    %143 = vector.shape_cast %142 : vector<1x16x384xf32> to vector<16x384xf32>
    %144 = arith.truncf %92 : vector<16x128xf32> to vector<16x128xbf16>
    %cst_53 = arith.constant dense<0.000000e+00> : vector<16x384xf32>
    %145 = tpu.matmul %144, %4, %cst_53 {dimension_numbers = #tpu.dot_dimension_numbers<[1], [0], [0], [1], [0, 0, 1, 1], [], []>} : vector<16x128xbf16>, vector<128x384xbf16>, vector<16x384xf32> -> vector<16x384xf32>
    %146 = vector.extract_strided_slice %143 {offsets = [0, 0], sizes = [16, 128], strides = [1, 1]} : vector<16x384xf32> to vector<16x128xf32>
    %147 = vector.extract_strided_slice %145 {offsets = [0, 0], sizes = [16, 128], strides = [1, 1]} : vector<16x384xf32> to vector<16x128xf32>
    %148 = arith.addf %146, %147 : vector<16x128xf32>
    %cst_54 = arith.constant 5.000000e-01 : f32
    %149 = vector.broadcast %cst_54 : f32 to vector<16x128xf32>
    %150 = arith.mulf %149, %148 : vector<16x128xf32>
    %151 = math.tanh %150 : vector<16x128xf32>
    %cst_55 = arith.constant 5.000000e-01 : f32
    %152 = vector.broadcast %cst_55 : f32 to vector<16x128xf32>
    %153 = arith.mulf %152, %151 : vector<16x128xf32>
    %cst_56 = arith.constant 5.000000e-01 : f32
    %154 = vector.broadcast %cst_56 : f32 to vector<16x128xf32>
    %155 = arith.addf %153, %154 : vector<16x128xf32>
    %156 = vector.extract_strided_slice %143 {offsets = [0, 128], sizes = [16, 128], strides = [1, 1]} : vector<16x384xf32> to vector<16x128xf32>
    %157 = vector.extract_strided_slice %145 {offsets = [0, 128], sizes = [16, 128], strides = [1, 1]} : vector<16x384xf32> to vector<16x128xf32>
    %158 = arith.addf %156, %157 : vector<16x128xf32>
    %cst_57 = arith.constant 5.000000e-01 : f32
    %159 = vector.broadcast %cst_57 : f32 to vector<16x128xf32>
    %160 = arith.mulf %159, %158 : vector<16x128xf32>
    %161 = math.tanh %160 : vector<16x128xf32>
    %cst_58 = arith.constant 5.000000e-01 : f32
    %162 = vector.broadcast %cst_58 : f32 to vector<16x128xf32>
    %163 = arith.mulf %162, %161 : vector<16x128xf32>
    %cst_59 = arith.constant 5.000000e-01 : f32
    %164 = vector.broadcast %cst_59 : f32 to vector<16x128xf32>
    %165 = arith.addf %163, %164 : vector<16x128xf32>
    %166 = vector.extract_strided_slice %143 {offsets = [0, 256], sizes = [16, 128], strides = [1, 1]} : vector<16x384xf32> to vector<16x128xf32>
    %167 = vector.extract_strided_slice %145 {offsets = [0, 256], sizes = [16, 128], strides = [1, 1]} : vector<16x384xf32> to vector<16x128xf32>
    %168 = vector.broadcast %6 : vector<1x128xf32> to vector<16x128xf32>
    %169 = arith.addf %167, %168 : vector<16x128xf32>
    %170 = arith.mulf %155, %169 : vector<16x128xf32>
    %171 = arith.addf %166, %170 : vector<16x128xf32>
    %172 = math.tanh %171 : vector<16x128xf32>
    %173 = arith.subf %92, %172 : vector<16x128xf32>
    %174 = arith.mulf %165, %173 : vector<16x128xf32>
    %175 = arith.addf %172, %174 : vector<16x128xf32>
    %c2_i32_60 = arith.constant 2 : i32
    %176 = arith.subi %c2_i32_60, %arg1 : i32
    %c3_i32_61 = arith.constant 3 : i32
    %177 = arith.muli %176, %c3_i32_61 : i32
    %178 = arith.addi %177, %140 : i32
    %c8_i32_62 = arith.constant 8 : i32
    %179 = arith.cmpi slt, %178, %c8_i32_62 : i32
    %180 = arith.select %179, %175, %92 : vector<16x128xf32>
    %181 = arith.index_cast %140 : i32 to index
    %c0_63 = arith.constant 0 : index
    %c0_64 = arith.constant 0 : index
    %182 = vector.load %arg11[%181, %c0_63, %c0_64] : memref<3x16x128xf32, #tpu.memory_space<vmem>>, vector<1x16x128xf32>
    %183 = vector.shape_cast %182 : vector<1x16x128xf32> to vector<16x128xf32>
    %184 = vector.shape_cast %180 : vector<16x128xf32> to vector<1x16x128xf32>
    tpu.vector_store %arg11[%181, %c0_63, %c0_64], %184 {strides = array<i32>} : memref<3x16x128xf32, #tpu.memory_space<vmem>>, vector<1x16x128xf32>,
    %c2_i32_65 = arith.constant 2 : i32
    %185 = arith.index_cast %c2_i32_65 : i32 to index
    %c0_66 = arith.constant 0 : index
    %c0_67 = arith.constant 0 : index
    %186 = vector.load %arg2[%185, %c0_66, %c0_67] : memref<3x16x384xf32, #tpu.memory_space<vmem>>, vector<1x16x384xf32>
    %187 = vector.shape_cast %186 : vector<1x16x384xf32> to vector<16x384xf32>
    %188 = arith.truncf %135 : vector<16x128xf32> to vector<16x128xbf16>
    %cst_68 = arith.constant dense<0.000000e+00> : vector<16x384xf32>
    %189 = tpu.matmul %188, %3, %cst_68 {dimension_numbers = #tpu.dot_dimension_numbers<[1], [0], [0], [1], [0, 0, 1, 1], [], []>} : vector<16x128xbf16>, vector<128x384xbf16>, vector<16x384xf32> -> vector<16x384xf32>
    %190 = vector.extract_strided_slice %187 {offsets = [0, 0], sizes = [16, 128], strides = [1, 1]} : vector<16x384xf32> to vector<16x128xf32>
    %191 = vector.extract_strided_slice %189 {offsets = [0, 0], sizes = [16, 128], strides = [1, 1]} : vector<16x384xf32> to vector<16x128xf32>
    %192 = arith.addf %190, %191 : vector<16x128xf32>
    %cst_69 = arith.constant 5.000000e-01 : f32
    %193 = vector.broadcast %cst_69 : f32 to vector<16x128xf32>
    %194 = arith.mulf %193, %192 : vector<16x128xf32>
    %195 = math.tanh %194 : vector<16x128xf32>
    %cst_70 = arith.constant 5.000000e-01 : f32
    %196 = vector.broadcast %cst_70 : f32 to vector<16x128xf32>
    %197 = arith.mulf %196, %195 : vector<16x128xf32>
    %cst_71 = arith.constant 5.000000e-01 : f32
    %198 = vector.broadcast %cst_71 : f32 to vector<16x128xf32>
    %199 = arith.addf %197, %198 : vector<16x128xf32>
    %200 = vector.extract_strided_slice %187 {offsets = [0, 128], sizes = [16, 128], strides = [1, 1]} : vector<16x384xf32> to vector<16x128xf32>
    %201 = vector.extract_strided_slice %189 {offsets = [0, 128], sizes = [16, 128], strides = [1, 1]} : vector<16x384xf32> to vector<16x128xf32>
    %202 = arith.addf %200, %201 : vector<16x128xf32>
    %cst_72 = arith.constant 5.000000e-01 : f32
    %203 = vector.broadcast %cst_72 : f32 to vector<16x128xf32>
    %204 = arith.mulf %203, %202 : vector<16x128xf32>
    %205 = math.tanh %204 : vector<16x128xf32>
    %cst_73 = arith.constant 5.000000e-01 : f32
    %206 = vector.broadcast %cst_73 : f32 to vector<16x128xf32>
    %207 = arith.mulf %206, %205 : vector<16x128xf32>
    %cst_74 = arith.constant 5.000000e-01 : f32
    %208 = vector.broadcast %cst_74 : f32 to vector<16x128xf32>
    %209 = arith.addf %207, %208 : vector<16x128xf32>
    %210 = vector.extract_strided_slice %187 {offsets = [0, 256], sizes = [16, 128], strides = [1, 1]} : vector<16x384xf32> to vector<16x128xf32>
    %211 = vector.extract_strided_slice %189 {offsets = [0, 256], sizes = [16, 128], strides = [1, 1]} : vector<16x384xf32> to vector<16x128xf32>
    %212 = vector.broadcast %5 : vector<1x128xf32> to vector<16x128xf32>
    %213 = arith.addf %211, %212 : vector<16x128xf32>
    %214 = arith.mulf %199, %213 : vector<16x128xf32>
    %215 = arith.addf %210, %214 : vector<16x128xf32>
    %216 = math.tanh %215 : vector<16x128xf32>
    %217 = arith.subf %135, %216 : vector<16x128xf32>
    %218 = arith.mulf %209, %217 : vector<16x128xf32>
    %219 = arith.addf %216, %218 : vector<16x128xf32>
    %c3_i32_75 = arith.constant 3 : i32
    %220 = arith.muli %arg1, %c3_i32_75 : i32
    %221 = arith.addi %220, %c2_i32_65 : i32
    %c8_i32_76 = arith.constant 8 : i32
    %222 = arith.cmpi slt, %221, %c8_i32_76 : i32
    %223 = arith.select %222, %219, %135 : vector<16x128xf32>
    %224 = arith.index_cast %c2_i32_65 : i32 to index
    %c0_77 = arith.constant 0 : index
    %c0_78 = arith.constant 0 : index
    %225 = vector.load %arg10[%224, %c0_77, %c0_78] : memref<3x16x128xf32, #tpu.memory_space<vmem>>, vector<1x16x128xf32>
    %226 = vector.shape_cast %225 : vector<1x16x128xf32> to vector<16x128xf32>
    %227 = vector.shape_cast %223 : vector<16x128xf32> to vector<1x16x128xf32>
    tpu.vector_store %arg10[%224, %c0_77, %c0_78], %227 {strides = array<i32>} : memref<3x16x128xf32, #tpu.memory_space<vmem>>, vector<1x16x128xf32>,
    %c2_i32_79 = arith.constant 2 : i32
    %228 = arith.subi %c2_i32_79, %c2_i32_65 : i32
    %229 = arith.index_cast %228 : i32 to index
    %c0_80 = arith.constant 0 : index
    %c0_81 = arith.constant 0 : index
    %230 = vector.load %arg6[%229, %c0_80, %c0_81] : memref<3x16x384xf32, #tpu.memory_space<vmem>>, vector<1x16x384xf32>
    %231 = vector.shape_cast %230 : vector<1x16x384xf32> to vector<16x384xf32>
    %232 = arith.truncf %180 : vector<16x128xf32> to vector<16x128xbf16>
    %cst_82 = arith.constant dense<0.000000e+00> : vector<16x384xf32>
    %233 = tpu.matmul %232, %4, %cst_82 {dimension_numbers = #tpu.dot_dimension_numbers<[1], [0], [0], [1], [0, 0, 1, 1], [], []>} : vector<16x128xbf16>, vector<128x384xbf16>, vector<16x384xf32> -> vector<16x384xf32>
    %234 = vector.extract_strided_slice %231 {offsets = [0, 0], sizes = [16, 128], strides = [1, 1]} : vector<16x384xf32> to vector<16x128xf32>
    %235 = vector.extract_strided_slice %233 {offsets = [0, 0], sizes = [16, 128], strides = [1, 1]} : vector<16x384xf32> to vector<16x128xf32>
    %236 = arith.addf %234, %235 : vector<16x128xf32>
    %cst_83 = arith.constant 5.000000e-01 : f32
    %237 = vector.broadcast %cst_83 : f32 to vector<16x128xf32>
    %238 = arith.mulf %237, %236 : vector<16x128xf32>
    %239 = math.tanh %238 : vector<16x128xf32>
    %cst_84 = arith.constant 5.000000e-01 : f32
    %240 = vector.broadcast %cst_84 : f32 to vector<16x128xf32>
    %241 = arith.mulf %240, %239 : vector<16x128xf32>
    %cst_85 = arith.constant 5.000000e-01 : f32
    %242 = vector.broadcast %cst_85 : f32 to vector<16x128xf32>
    %243 = arith.addf %241, %242 : vector<16x128xf32>
    %244 = vector.extract_strided_slice %231 {offsets = [0, 128], sizes = [16, 128], strides = [1, 1]} : vector<16x384xf32> to vector<16x128xf32>
    %245 = vector.extract_strided_slice %233 {offsets = [0, 128], sizes = [16, 128], strides = [1, 1]} : vector<16x384xf32> to vector<16x128xf32>
    %246 = arith.addf %244, %245 : vector<16x128xf32>
    %cst_86 = arith.constant 5.000000e-01 : f32
    %247 = vector.broadcast %cst_86 : f32 to vector<16x128xf32>
    %248 = arith.mulf %247, %246 : vector<16x128xf32>
    %249 = math.tanh %248 : vector<16x128xf32>
    %cst_87 = arith.constant 5.000000e-01 : f32
    %250 = vector.broadcast %cst_87 : f32 to vector<16x128xf32>
    %251 = arith.mulf %250, %249 : vector<16x128xf32>
    %cst_88 = arith.constant 5.000000e-01 : f32
    %252 = vector.broadcast %cst_88 : f32 to vector<16x128xf32>
    %253 = arith.addf %251, %252 : vector<16x128xf32>
    %254 = vector.extract_strided_slice %231 {offsets = [0, 256], sizes = [16, 128], strides = [1, 1]} : vector<16x384xf32> to vector<16x128xf32>
    %255 = vector.extract_strided_slice %233 {offsets = [0, 256], sizes = [16, 128], strides = [1, 1]} : vector<16x384xf32> to vector<16x128xf32>
    %256 = vector.broadcast %6 : vector<1x128xf32> to vector<16x128xf32>
    %257 = arith.addf %255, %256 : vector<16x128xf32>
    %258 = arith.mulf %243, %257 : vector<16x128xf32>
    %259 = arith.addf %254, %258 : vector<16x128xf32>
    %260 = math.tanh %259 : vector<16x128xf32>
    %261 = arith.subf %180, %260 : vector<16x128xf32>
    %262 = arith.mulf %253, %261 : vector<16x128xf32>
    %263 = arith.addf %260, %262 : vector<16x128xf32>
    %c2_i32_89 = arith.constant 2 : i32
    %264 = arith.subi %c2_i32_89, %arg1 : i32
    %c3_i32_90 = arith.constant 3 : i32
    %265 = arith.muli %264, %c3_i32_90 : i32
    %266 = arith.addi %265, %228 : i32
    %c8_i32_91 = arith.constant 8 : i32
    %267 = arith.cmpi slt, %266, %c8_i32_91 : i32
    %268 = arith.select %267, %263, %180 : vector<16x128xf32>
    %269 = arith.index_cast %228 : i32 to index
    %c0_92 = arith.constant 0 : index
    %c0_93 = arith.constant 0 : index
    %270 = vector.load %arg11[%269, %c0_92, %c0_93] : memref<3x16x128xf32, #tpu.memory_space<vmem>>, vector<1x16x128xf32>
    %271 = vector.shape_cast %270 : vector<1x16x128xf32> to vector<16x128xf32>
    %272 = vector.shape_cast %268 : vector<16x128xf32> to vector<1x16x128xf32>
    tpu.vector_store %arg11[%269, %c0_92, %c0_93], %272 {strides = array<i32>} : memref<3x16x128xf32, #tpu.memory_space<vmem>>, vector<1x16x128xf32>,
    %c3_i32_94 = arith.constant 3 : i32
    %c0_95 = arith.constant 0 : index
    %c0_96 = arith.constant 0 : index
    %273 = vector.load %arg12[%c0_95, %c0_96] : memref<16x128xf32, #tpu.memory_space<vmem>>, vector<16x128xf32>
    tpu.vector_store %arg12[%c0_95, %c0_96], %223 {strides = array<i32>} : memref<16x128xf32, #tpu.memory_space<vmem>>, vector<16x128xf32>,
    %c0_97 = arith.constant 0 : index
    %c0_98 = arith.constant 0 : index
    %274 = vector.load %arg13[%c0_97, %c0_98] : memref<16x128xf32, #tpu.memory_space<vmem>>, vector<16x128xf32>
    tpu.vector_store %arg13[%c0_97, %c0_98], %268 {strides = array<i32>} : memref<16x128xf32, #tpu.memory_space<vmem>>, vector<16x128xf32>,
    return
  }
  func.func @transform_0(%arg0: i32, %arg1: i32) -> (i32, i32, i32) {
    %c0_i32 = arith.constant 0 : i32
    %c0_i32_0 = arith.constant 0 : i32
    return %arg1, %arg0, %c0_i32 : i32, i32, i32
  }
  func.func @transform_1(%arg0: i32, %arg1: i32) -> (i32, i32) {
    %c0_i32 = arith.constant 0 : i32
    %c0_i32_0 = arith.constant 0 : i32
    %c0_i32_1 = arith.constant 0 : i32
    return %c0_i32, %c0_i32_0 : i32, i32
  }
  func.func @transform_2(%arg0: i32, %arg1: i32) -> (i32, i32) {
    %c0_i32 = arith.constant 0 : i32
    %c0_i32_0 = arith.constant 0 : i32
    %c0_i32_1 = arith.constant 0 : i32
    return %c0_i32, %c0_i32_0 : i32, i32
  }
  func.func @transform_3(%arg0: i32, %arg1: i32) -> (i32, i32) {
    %c0_i32 = arith.constant 0 : i32
    %c0_i32_0 = arith.constant 0 : i32
    return %arg0, %c0_i32 : i32, i32
  }
  func.func @transform_4(%arg0: i32, %arg1: i32) -> (i32, i32, i32) {
    %c2_i32 = arith.constant 2 : i32
    %0 = arith.subi %c2_i32, %arg1 : i32
    %c0_i32 = arith.constant 0 : i32
    %c0_i32_0 = arith.constant 0 : i32
    return %0, %arg0, %c0_i32 : i32, i32, i32
  }
  func.func @transform_5(%arg0: i32, %arg1: i32) -> (i32, i32) {
    %c0_i32 = arith.constant 0 : i32
    %c0_i32_0 = arith.constant 0 : i32
    %c0_i32_1 = arith.constant 0 : i32
    return %c0_i32, %c0_i32_0 : i32, i32
  }
  func.func @transform_6(%arg0: i32, %arg1: i32) -> (i32, i32) {
    %c0_i32 = arith.constant 0 : i32
    %c0_i32_0 = arith.constant 0 : i32
    %c0_i32_1 = arith.constant 0 : i32
    return %c0_i32, %c0_i32_0 : i32, i32
  }
  func.func @transform_7(%arg0: i32, %arg1: i32) -> (i32, i32) {
    %c0_i32 = arith.constant 0 : i32
    %c0_i32_0 = arith.constant 0 : i32
    return %arg0, %c0_i32 : i32, i32
  }
  func.func @transform_8(%arg0: i32, %arg1: i32) -> (i32, i32, i32) {
    %c0_i32 = arith.constant 0 : i32
    %c0_i32_0 = arith.constant 0 : i32
    return %arg1, %arg0, %c0_i32 : i32, i32, i32
  }
  func.func @transform_9(%arg0: i32, %arg1: i32) -> (i32, i32, i32) {
    %c2_i32 = arith.constant 2 : i32
    %0 = arith.subi %c2_i32, %arg1 : i32
    %c0_i32 = arith.constant 0 : i32
    %c0_i32_0 = arith.constant 0 : i32
    return %0, %arg0, %c0_i32 : i32, i32, i32
  }
}

</mosaic_0001>

<llo_original>
// kernel: tpu_custom_call.1
$region0: #{tpu_custom_call.1}
  #allocation0 [shape = 'u32[]', space=smem, size = 0x4, offset = 0x4, fixed_abs, tag = 'smem constant byte address 0x4 - core index']
  #allocation1 [shape = 'u32[144,128]{1,0:T(1,128)}', space=vmem, size = 0x12000, scoped, tag = 'internal scratch']
  #allocation2 [shape = 'f32[16,128]{1,0:T(8,128)}', space=vmem, size = 0x2000, scoped, tag = 'scratch operand']
  #allocation3 [shape = 'f32[16,128]{1,0:T(8,128)}', space=vmem, size = 0x2000, scoped, tag = 'scratch operand']
  %s0 = inlined_call_operand.hbm [shape: f32[9,16,384], index: 0, kind: input, shape index: {}]
  %s1 = inlined_call_operand.hbm [shape: bf16[128,384], index: 1, kind: input, shape index: {}]
  %s2 = inlined_call_operand.vmem [shape: f32[1,128], index: 2, kind: input, shape index: {}]
  %s3 = inlined_call_operand.hbm [shape: f32[16,128], index: 3, kind: input, shape index: {}]
  %s4 = inlined_call_operand.hbm [shape: f32[9,16,384], index: 4, kind: input, shape index: {}]
  %s5 = inlined_call_operand.hbm [shape: bf16[128,384], index: 5, kind: input, shape index: {}]
  %s6 = inlined_call_operand.vmem [shape: f32[1,128], index: 6, kind: input, shape index: {}]
  %s7 = inlined_call_operand.vmem [shape: f32[16,128], index: 7, kind: input, shape index: {}]
  %s8 = inlined_call_operand.hbm [shape: f32[9,16,128], index: 8, kind: output, shape index: {0}]
  %s9 = inlined_call_operand.hbm [shape: f32[9,16,128], index: 9, kind: output, shape index: {1}]
  %10 = xla_tuple %s8, %s9
  %s11 = sld [smem:[#allocation0]]
  $region97: #{tpu_custom_call.1} parent=0
    _
  %s13 = ssub.s32 1, %s11
  %s14 = scalar_select 0, %s13, %s11
  $region1: #{tpu_custom_call.1} parent=0
    #allocation4 [shape = 'u8[147456]{0}', space=vmem, size = 0x24000, scoped, tag = 'input window, operand 0']
    #allocation5 [shape = 's32[2]{0}', space=sflag, size = 0x8, scoped, tag = 'scoped memory for tpu_custom_call.1']
    #allocation6 [shape = 's32[2]{0}', space=sflag, size = 0x8, scoped, tag = 'scoped memory for tpu_custom_call.1']
    #allocation7 [shape = 'u8[98304]{0}', space=vmem, size = 0x18000, scoped, tag = 'input window, operand 1, single buffered']
    #allocation8 [shape = 's32[1]{0}', space=sflag, size = 0x4, scoped, tag = 'scoped memory for tpu_custom_call.1']
    #allocation9 [shape = 'u8[8192]{0}', space=vmem, size = 0x2000, scoped, tag = 'input window, operand 3, single buffered']
    #allocation10 [shape = 'u8[147456]{0}', space=vmem, size = 0x24000, scoped, tag = 'input window, operand 4']
    #allocation11 [shape = 's32[2]{0}', space=sflag, size = 0x8, scoped, tag = 'scoped memory for tpu_custom_call.1']
    #allocation12 [shape = 'u8[98304]{0}', space=vmem, size = 0x18000, scoped, tag = 'input window, operand 5, single buffered']
    #allocation13 [shape = 'u8[49152]{0}', space=vmem, size = 0xc000, scoped, tag = 'output window, operand 0']
    #allocation14 [shape = 'u8[49152]{0}', space=vmem, size = 0xc000, scoped, tag = 'output window, operand 1']
    #allocation15 [shape = 's32[2]{0}', space=sflag, size = 0x8, scoped, tag = 'scoped memory for tpu_custom_call.1']
    %15 = vsyncpa [#allocation5], 0
    %s16 = scalar_lea.sflag [#allocation5], 1
    %17 = vsyncpa %s16, 0
    %18 = vsyncpa [#allocation8], 0
    %19 = vsyncpa [#allocation11], 0
    %s20 = scalar_lea.sflag [#allocation11], 1
    %21 = vsyncpa %s20, 0
    %22 = vsyncpa [#allocation6], 0
    %s23 = scalar_lea.sflag [#allocation6], 1
    %24 = vsyncpa %s23, 0
    %25 = vsyncpa [#allocation15], 0
    %s26 = scalar_lea.sflag [#allocation15], 1
    %27 = vsyncpa %s26, 0
    loop: start=0, step=1, limit=5
    $region2: #{tpu_custom_call.1} parent=1 // loop_pre_header
      _
    $region3: #{tpu_custom_call.1} parent=1 // loop_header
      %s29 = sphi 0, %s33
      %p30 = scmp.ge.s32.totalorder %s29, 5
      %s36 = sphi 0, %s48
      %s37 = sphi 0, %s44
      %s38 = sphi 0, %s36
      %s39 = sphi 0, %s37
      %s40 = sphi 0, %s38
      %s41 = sphi 0, %s39
      %s53 = sphi 0, %s55
      %s56 = sphi 0, %s53
      %s57 = sphi 0, %s56
      %s73 = sphi 0, %s57
      %s77 = sphi 0, %s77
      %s79 = sphi 0, %s77
      %s80 = sphi 0, %s79
      %s94 = sphi 0, %s80
      %s98 = sphi 0, %s98
      %s100 = sphi 0, %s98
      %s101 = sphi 0, %s100
      %s115 = sphi 0, %s101
      %s121 = sphi 0, %s123
      %s124 = sphi 0, %s121
      %s125 = sphi 0, %s124
      %s141 = sphi 0, %s125
      %s151 = sphi 0, %s153
      %s154 = sphi 0, %s151
      %s155 = sphi 0, %s154
      %s171 = sphi 0, %s155
      %s175 = sphi 0, %s175
      %s177 = sphi 0, %s175
      %s178 = sphi 0, %s177
      %s192 = sphi 0, %s178
      %s196 = sphi 0, %s196
      %s198 = sphi 0, %s196
      %s199 = sphi 0, %s198
      %s213 = sphi 0, %s199
      %s219 = sphi 0, %s221
      %s222 = sphi 0, %s219
      %s223 = sphi 0, %s222
      %s239 = sphi 0, %s223
      %s247 = sphi 0, %s249
      %s250 = sphi 0, %s247
      %s251 = sphi 0, %s250
      %s267 = sphi 0, %s251
      %s277 = sphi 0, %s279
      %s280 = sphi 0, %s277
      %s281 = sphi 0, %s280
      %s297 = sphi 0, %s281
    $region4: #{tpu_custom_call.1} parent=1 // loop_header_branch
      %32 = sbr.rel (%p30) target = $region8
    $region5: #{tpu_custom_call.1} parent=1 // loop_body
      %s34 = ssub.s32 %s29, 1
      %s35 = ssub.s32 %s29, 2
      %s42 = sadd.s32 1, %s37
      %p43 = scmp.ge.s32.totalorder %s42, 3
      %s44 = scalar_select %p43, 0, %s42
      %s45 = sadd.s32 1, %s36
      %s46 = scalar_select %p43, %s45, %s36
      %p47 = scmp.ge.s32.totalorder %s46, 1
      %s48 = scalar_select %p47, 0, %s46
      %s49 = ssub.s32 %s37, %s44
      %s50 = ssub.s32 %s36, %s48
      %s51 = sor.u32 %s49, %s50
      %p52 = scmp.eq.s32.totalorder %s51, 0
      %s54 = sadd.s32 %s53, 1
      %s55 = scalar_select %p52, %s53, %s54
      %p58 = pneg %p52
      %p59 = scmp.eq.s32.totalorder %s29, 2
      %p60 = por %p58, %p59
      %p61 = scmp.ne.s32.totalorder %s53, %s56
      %p62 = scmp.eq.s32.totalorder %s29, 0
      %p63 = por %p61, %p62
      %p64 = scmp.ne.s32.totalorder %s53, %s56
      %p65 = scmp.eq.s32.totalorder %s34, 2
      %p66 = por %p64, %p65
      %p67 = scmp.ne.s32.totalorder %s56, %s57
      %p68 = scmp.eq.s32.totalorder %s34, 0
      %p69 = por %p67, %p68
      %p70 = scmp.ne.s32.totalorder %s56, %s57
      %p71 = scmp.eq.s32.totalorder %s35, 2
      %p72 = por %p70, %p71
      %p74 = scmp.ne.s32.totalorder %s57, %s73
      %p75 = scmp.eq.s32.totalorder %s35, 0
      %p76 = por %p74, %p75
      %s78 = sadd.s32 %s77, 1
      %p81 = scmp.eq.s32.totalorder %s29, 2
      %p82 = scmp.ne.s32.totalorder %s77, %s79
      %p83 = scmp.eq.s32.totalorder %s29, 0
      %p84 = por %p82, %p83
      %p85 = scmp.ne.s32.totalorder %s77, %s79
      %p86 = scmp.eq.s32.totalorder %s34, 2
      %p87 = por %p85, %p86
      %p88 = scmp.ne.s32.totalorder %s79, %s80
      %p89 = scmp.eq.s32.totalorder %s34, 0
      %p90 = por %p88, %p89
      %p91 = scmp.ne.s32.totalorder %s79, %s80
      %p92 = scmp.eq.s32.totalorder %s35, 2
      %p93 = por %p91, %p92
      %p95 = scmp.ne.s32.totalorder %s80, %s94
      %p96 = scmp.eq.s32.totalorder %s35, 0
      %p97 = por %p95, %p96
      %s99 = sadd.s32 %s98, 1
      %p102 = scmp.eq.s32.totalorder %s29, 2
      %p103 = scmp.ne.s32.totalorder %s98, %s100
      %p104 = scmp.eq.s32.totalorder %s29, 0
      %p105 = por %p103, %p104
      %p106 = scmp.ne.s32.totalorder %s98, %s100
      %p107 = scmp.eq.s32.totalorder %s34, 2
      %p108 = por %p106, %p107
      %p109 = scmp.ne.s32.totalorder %s100, %s101
      %p110 = scmp.eq.s32.totalorder %s34, 0
      %p111 = por %p109, %p110
      %p112 = scmp.ne.s32.totalorder %s100, %s101
      %p113 = scmp.eq.s32.totalorder %s35, 2
      %p114 = por %p112, %p113
      %p116 = scmp.ne.s32.totalorder %s101, %s115
      %p117 = scmp.eq.s32.totalorder %s35, 0
      %p118 = por %p116, %p117
      %s119 = ssub.s32 %s36, %s48
      %p120 = scmp.eq.s32.totalorder %s119, 0
      %s122 = sadd.s32 %s121, 1
      %s123 = scalar_select %p120, %s121, %s122
      %p126 = pneg %p120
      %p127 = scmp.eq.s32.totalorder %s29, 2
      %p128 = por %p126, %p127
      %p129 = scmp.ne.s32.totalorder %s121, %s124
      %p130 = scmp.eq.s32.totalorder %s29, 0
      %p131 = por %p129, %p130
      %p132 = scmp.ne.s32.totalorder %s121, %s124
      %p133 = scmp.eq.s32.totalorder %s34, 2
      %p134 = por %p132, %p133
      %p135 = scmp.ne.s32.totalorder %s124, %s125
      %p136 = scmp.eq.s32.totalorder %s34, 0
      %p137 = por %p135, %p136
      %p138 = scmp.ne.s32.totalorder %s124, %s125
      %p139 = scmp.eq.s32.totalorder %s35, 2
      %p140 = por %p138, %p139
      %p142 = scmp.ne.s32.totalorder %s125, %s141
      %p143 = scmp.eq.s32.totalorder %s35, 0
      %p144 = por %p142, %p143
      %s145 = ssub.s32 2, %s37
      %s146 = ssub.s32 2, %s44
      %s147 = ssub.s32 %s145, %s146
      %s148 = ssub.s32 %s36, %s48
      %s149 = sor.u32 %s147, %s148
      %p150 = scmp.eq.s32.totalorder %s149, 0
      %s152 = sadd.s32 %s151, 1
      %s153 = scalar_select %p150, %s151, %s152
      %p156 = pneg %p150
      %p157 = scmp.eq.s32.totalorder %s29, 2
      %p158 = por %p156, %p157
      %p159 = scmp.ne.s32.totalorder %s151, %s154
      %p160 = scmp.eq.s32.totalorder %s29, 0
      %p161 = por %p159, %p160
      %p162 = scmp.ne.s32.totalorder %s151, %s154
      %p163 = scmp.eq.s32.totalorder %s34, 2
      %p164 = por %p162, %p163
      %p165 = scmp.ne.s32.totalorder %s154, %s155
      %p166 = scmp.eq.s32.totalorder %s34, 0
      %p167 = por %p165, %p166
      %p168 = scmp.ne.s32.totalorder %s154, %s155
      %p169 = scmp.eq.s32.totalorder %s35, 2
      %p170 = por %p168, %p169
      %p172 = scmp.ne.s32.totalorder %s155, %s171
      %p173 = scmp.eq.s32.totalorder %s35, 0
      %p174 = por %p172, %p173
      %s176 = sadd.s32 %s175, 1
      %p179 = scmp.eq.s32.totalorder %s29, 2
      %p180 = scmp.ne.s32.totalorder %s175, %s177
      %p181 = scmp.eq.s32.totalorder %s29, 0
      %p182 = por %p180, %p181
      %p183 = scmp.ne.s32.totalorder %s175, %s177
      %p184 = scmp.eq.s32.totalorder %s34, 2
      %p185 = por %p183, %p184
      %p186 = scmp.ne.s32.totalorder %s177, %s178
      %p187 = scmp.eq.s32.totalorder %s34, 0
      %p188 = por %p186, %p187
      %p189 = scmp.ne.s32.totalorder %s177, %s178
      %p190 = scmp.eq.s32.totalorder %s35, 2
      %p191 = por %p189, %p190
      %p193 = scmp.ne.s32.totalorder %s178, %s192
      %p194 = scmp.eq.s32.totalorder %s35, 0
      %p195 = por %p193, %p194
      %s197 = sadd.s32 %s196, 1
      %p200 = scmp.eq.s32.totalorder %s29, 2
      %p201 = scmp.ne.s32.totalorder %s196, %s198
      %p202 = scmp.eq.s32.totalorder %s29, 0
      %p203 = por %p201, %p202
      %p204 = scmp.ne.s32.totalorder %s196, %s198
      %p205 = scmp.eq.s32.totalorder %s34, 2
      %p206 = por %p204, %p205
      %p207 = scmp.ne.s32.totalorder %s198, %s199
      %p208 = scmp.eq.s32.totalorder %s34, 0
      %p209 = por %p207, %p208
      %p210 = scmp.ne.s32.totalorder %s198, %s199
      %p211 = scmp.eq.s32.totalorder %s35, 2
      %p212 = por %p210, %p211
      %p214 = scmp.ne.s32.totalorder %s199, %s213
      %p215 = scmp.eq.s32.totalorder %s35, 0
      %p216 = por %p214, %p215
      %s217 = ssub.s32 %s36, %s48
      %p218 = scmp.eq.s32.totalorder %s217, 0
      %s220 = sadd.s32 %s219, 1
      %s221 = scalar_select %p218, %s219, %s220
      %p224 = pneg %p218
      %p225 = scmp.eq.s32.totalorder %s29, 2
      %p226 = por %p224, %p225
      %p227 = scmp.ne.s32.totalorder %s219, %s222
      %p228 = scmp.eq.s32.totalorder %s29, 0
      %p229 = por %p227, %p228
      %p230 = scmp.ne.s32.totalorder %s219, %s222
      %p231 = scmp.eq.s32.totalorder %s34, 2
      %p232 = por %p230, %p231
      %p233 = scmp.ne.s32.totalorder %s222, %s223
      %p234 = scmp.eq.s32.totalorder %s34, 0
      %p235 = por %p233, %p234
      %p236 = scmp.ne.s32.totalorder %s222, %s223
      %p237 = scmp.eq.s32.totalorder %s35, 2
      %p238 = por %p236, %p237
      %p240 = scmp.ne.s32.totalorder %s223, %s239
      %p241 = scmp.eq.s32.totalorder %s35, 0
      %p242 = por %p240, %p241
      %s243 = ssub.s32 %s37, %s44
      %s244 = ssub.s32 %s36, %s48
      %s245 = sor.u32 %s243, %s244
      %p246 = scmp.eq.s32.totalorder %s245, 0
      %s248 = sadd.s32 %s247, 1
      %s249 = scalar_select %p246, %s247, %s248
      %p252 = pneg %p246
      %p253 = scmp.eq.s32.totalorder %s29, 2
      %p254 = por %p252, %p253
      %p255 = scmp.ne.s32.totalorder %s247, %s250
      %p256 = scmp.eq.s32.totalorder %s29, 0
      %p257 = por %p255, %p256
      %p258 = scmp.ne.s32.totalorder %s247, %s250
      %p259 = scmp.eq.s32.totalorder %s34, 2
      %p260 = por %p258, %p259
      %p261 = scmp.ne.s32.totalorder %s250, %s251
      %p262 = scmp.eq.s32.totalorder %s34, 0
      %p263 = por %p261, %p262
      %p264 = scmp.ne.s32.totalorder %s250, %s251
      %p265 = scmp.eq.s32.totalorder %s35, 2
      %p266 = por %p264, %p265
      %p268 = scmp.ne.s32.totalorder %s251, %s267
      %p269 = scmp.eq.s32.totalorder %s35, 0
      %p270 = por %p268, %p269
      %s271 = ssub.s32 2, %s37
      %s272 = ssub.s32 2, %s44
      %s273 = ssub.s32 %s271, %s272
      %s274 = ssub.s32 %s36, %s48
      %s275 = sor.u32 %s273, %s274
      %p276 = scmp.eq.s32.totalorder %s275, 0
      %s278 = sadd.s32 %s277, 1
      %s279 = scalar_select %p276, %s277, %s278
      %p282 = pneg %p276
      %p283 = scmp.eq.s32.totalorder %s29, 2
      %p284 = por %p282, %p283
      %p285 = scmp.ne.s32.totalorder %s277, %s280
      %p286 = scmp.eq.s32.totalorder %s29, 0
      %p287 = por %p285, %p286
      %p288 = scmp.ne.s32.totalorder %s277, %s280
      %p289 = scmp.eq.s32.totalorder %s34, 2
      %p290 = por %p288, %p289
      %p291 = scmp.ne.s32.totalorder %s280, %s281
      %p292 = scmp.eq.s32.totalorder %s34, 0
      %p293 = por %p291, %p292
      %p294 = scmp.ne.s32.totalorder %s280, %s281
      %p295 = scmp.eq.s32.totalorder %s35, 2
      %p296 = por %p294, %p295
      %p298 = scmp.ne.s32.totalorder %s281, %s297
      %p299 = scmp.eq.s32.totalorder %s35, 0
      %p300 = por %p298, %p299
      %p301 = scmp.le.s32.totalorder 1, %s29
      %p302 = scmp.lt.s32.totalorder %s29, 4
      %p303 = pnand %p301, %p302
      %p304 = pneg %p303
      // Predicated region
      $region9: #{tpu_custom_call.1} parent=5 // pred_check
        _
      $region10: #{tpu_custom_call.1} parent=5 // pred_check_branch
        %306 = sbr.rel (%p303) target = $region12
      $region11: #{tpu_custom_call.1} parent=5 // pred_region
        %s307 = ssub.s32 %s29, 1
        // Predicated region
        $region13: #{tpu_custom_call.1} parent=11 // pred_check
          %p308 = pneg %p90
        $region14: #{tpu_custom_call.1} parent=11 // pred_check_branch
          %310 = sbr.rel (%p308) target = $region16
        $region15: #{tpu_custom_call.1} parent=11 // pred_region
          %s312 = ssub.s32 3072, 3072
          %313 = vsyncadd [#allocation8], %s312
          %s314 = sshll.u32 [#allocation7], 4
          %s315 = int_to_ptr.vmem [resolvable:$true] %s314
          %320 = dma.hbm_to_vmem [thread:$0]  %s1, 3072, %s315, [#allocation8], 192, 192, 12
        $region16: #{tpu_custom_call.1} parent=11 // pred_fallthru
          _
        // Predicated region
        $region17: #{tpu_custom_call.1} parent=11 // pred_check
          %p321 = pneg %p111
        $region18: #{tpu_custom_call.1} parent=11 // pred_check_branch
          %323 = sbr.rel (%p321) target = $region20
        $region19: #{tpu_custom_call.1} parent=11 // pred_region
          _
        $region20: #{tpu_custom_call.1} parent=11 // pred_fallthru
          _
        // Predicated region
        $region21: #{tpu_custom_call.1} parent=11 // pred_check
          %p324 = pneg %p137
        $region22: #{tpu_custom_call.1} parent=11 // pred_check_branch
          %326 = sbr.rel (%p324) target = $region24
        $region23: #{tpu_custom_call.1} parent=11 // pred_region
          %s327 = smul.u32 2, %s38
          %s329 = ssub.s32 256, 256
          %330 = vsyncadd [#allocation8], %s329
          %s331 = smul.addr %s327, 128
          %s332 = scalar_lea.hbm %s3, %s331
          %s333 = sshll.u32 [#allocation9], 4
          %s334 = int_to_ptr.vmem [resolvable:$true] %s333
          %339 = dma.hbm_to_vmem [thread:$0]  %s332, 256, %s334, [#allocation8], 128, 128, 8
        $region24: #{tpu_custom_call.1} parent=11 // pred_fallthru
          _
        // Predicated region
        $region25: #{tpu_custom_call.1} parent=11 // pred_check
          %p340 = pneg %p188
        $region26: #{tpu_custom_call.1} parent=11 // pred_check_branch
          %342 = sbr.rel (%p340) target = $region28
        $region27: #{tpu_custom_call.1} parent=11 // pred_region
          %s344 = ssub.s32 3072, 3072
          %345 = vsyncadd [#allocation11], %s344
          %s346 = sshll.u32 [#allocation12], 4
          %s347 = int_to_ptr.vmem [resolvable:$true] %s346
          %352 = dma.hbm_to_vmem [thread:$0]  %s5, 3072, %s347, [#allocation11], 192, 192, 12
        $region28: #{tpu_custom_call.1} parent=11 // pred_fallthru
          _
        // Predicated region
        $region29: #{tpu_custom_call.1} parent=11 // pred_check
          %p353 = pneg %p209
        $region30: #{tpu_custom_call.1} parent=11 // pred_check_branch
          %355 = sbr.rel (%p353) target = $region32
        $region31: #{tpu_custom_call.1} parent=11 // pred_region
          _
        $region32: #{tpu_custom_call.1} parent=11 // pred_fallthru
          _
        // Predicated region
        $region33: #{tpu_custom_call.1} parent=11 // pred_check
          %p356 = pneg %p235
        $region34: #{tpu_custom_call.1} parent=11 // pred_check_branch
          %358 = sbr.rel (%p356) target = $region36
        $region35: #{tpu_custom_call.1} parent=11 // pred_region
          %s359 = smul.u32 2, %s38
          %p360 = scmp.lt.s32.totalorder %s359, 1
          %s361 = scalar_select %p360, %s359, 1
          %s362 = smul.addr %s361, 8
          %s363 = scalar_lea.vmem %s7, %s362
          %s364 = smul.u32 2, %s38
        $region36: #{tpu_custom_call.1} parent=11 // pred_fallthru
          _
      $region12: #{tpu_custom_call.1} parent=5 // pred_fallthru
        _
      %p365 = scmp.lt.s32.totalorder %s29, 3
      // Predicated region
      $region37: #{tpu_custom_call.1} parent=5 // pred_check
        %p366 = pneg %p365
      $region38: #{tpu_custom_call.1} parent=5 // pred_check_branch
        %368 = sbr.rel (%p366) target = $region40
      $region39: #{tpu_custom_call.1} parent=5 // pred_region
        // Predicated region
        $region41: #{tpu_custom_call.1} parent=39 // pred_check
          %p369 = pneg %p63
        $region42: #{tpu_custom_call.1} parent=39 // pred_check_branch
          %371 = sbr.rel (%p369) target = $region44
        $region43: #{tpu_custom_call.1} parent=39 // pred_region
          %s372 = sand.u32 %s53, 1
          %s373 = scalar_lea.sflag [#allocation5], %s372
          %s374 = sand.u32 %s53, 1
          %s375 = smul.addr %s374, 144
          %s376 = scalar_lea.vmem [#allocation4], %s375
          %s377 = smul.u32 3, %s37
          %s378 = smul.u32 2, %s36
          %s380 = ssub.s32 2304, 2304
          %381 = vsyncadd %s373, %s380
          %s382 = smul.addr %s378, 3
          %s383 = smul.addr %s377, 6
          %s384 = sadd.s32 %s382, %s383
          %s385 = smul.addr %s384, 128
          %s386 = scalar_lea.hbm %s0, %s385
          %s387 = sshll.u32 %s376, 4
          %s388 = int_to_ptr.vmem [resolvable:$true] %s387
          %393 = dma.hbm_to_vmem [thread:$0]  %s386, 2304, %s388, %s373, 384, 384, 24
        $region44: #{tpu_custom_call.1} parent=39 // pred_fallthru
          _
        // Predicated region
        $region45: #{tpu_custom_call.1} parent=39 // pred_check
          %p394 = pneg %p161
        $region46: #{tpu_custom_call.1} parent=39 // pred_check_branch
          %396 = sbr.rel (%p394) target = $region48
        $region47: #{tpu_custom_call.1} parent=39 // pred_region
          %s397 = sand.u32 %s29, 1
          %s398 = scalar_lea.sflag [#allocation11], %s397
          %s399 = sand.u32 %s151, 1
          %s400 = smul.addr %s399, 144
          %s401 = scalar_lea.vmem [#allocation10], %s400
          %s402 = ssub.s32 2, %s37
          %s403 = smul.u32 3, %s402
          %s404 = smul.u32 2, %s36
          %s406 = ssub.s32 2304, 2304
          %407 = vsyncadd %s398, %s406
          %s408 = smul.addr %s404, 3
          %s409 = smul.addr %s403, 6
          %s410 = sadd.s32 %s408, %s409
          %s411 = smul.addr %s410, 128
          %s412 = scalar_lea.hbm %s4, %s411
          %s413 = sshll.u32 %s401, 4
          %s414 = int_to_ptr.vmem [resolvable:$true] %s413
          %419 = dma.hbm_to_vmem [thread:$0]  %s412, 2304, %s414, %s398, 384, 384, 24
        $region48: #{tpu_custom_call.1} parent=39 // pred_fallthru
          _
      $region40: #{tpu_custom_call.1} parent=5 // pred_fallthru
        _
      %p420 = scmp.le.s32.totalorder 1, %s29
      %p421 = scmp.lt.s32.totalorder %s29, 4
      %p422 = pnand %p420, %p421
      %p423 = pneg %p422
      // Predicated region
      $region49: #{tpu_custom_call.1} parent=5 // pred_check
        _
      $region50: #{tpu_custom_call.1} parent=5 // pred_check_branch
        %425 = sbr.rel (%p422) target = $region52
      $region51: #{tpu_custom_call.1} parent=5 // pred_region
        %s426 = ssub.s32 %s29, 1
        %s427 = sand.u32 %s56, 1
        %s428 = scalar_lea.sflag [#allocation5], %s427
        %s429 = sand.u32 %s56, 1
        %s430 = smul.addr %s429, 144
        %s431 = scalar_lea.vmem [#allocation4], %s430
        // Predicated region
        $region53: #{tpu_custom_call.1} parent=51 // pred_check
          %p432 = pneg %p69
        $region54: #{tpu_custom_call.1} parent=51 // pred_check_branch
          %434 = sbr.rel (%p432) target = $region56
        $region55: #{tpu_custom_call.1} parent=51 // pred_region
          %435 = dma.done %s428, 2304
        $region56: #{tpu_custom_call.1} parent=51 // pred_fallthru
          _
        // Predicated region
        $region57: #{tpu_custom_call.1} parent=51 // pred_check
          %p436 = pneg %p90
        $region58: #{tpu_custom_call.1} parent=51 // pred_check_branch
          %438 = sbr.rel (%p436) target = $region60
        $region59: #{tpu_custom_call.1} parent=51 // pred_region
          %439 = dma.done [#allocation8], 3072
        $region60: #{tpu_custom_call.1} parent=51 // pred_fallthru
          _
        // Predicated region
        $region61: #{tpu_custom_call.1} parent=51 // pred_check
          %p440 = pneg %p137
        $region62: #{tpu_custom_call.1} parent=51 // pred_check_branch
          %442 = sbr.rel (%p440) target = $region64
        $region63: #{tpu_custom_call.1} parent=51 // pred_region
          %443 = dma.done [#allocation8], 256
        $region64: #{tpu_custom_call.1} parent=51 // pred_fallthru
          _
        %s444 = sand.u32 %s34, 1
        %s445 = scalar_lea.sflag [#allocation11], %s444
        %s446 = sand.u32 %s154, 1
        %s447 = smul.addr %s446, 144
        %s448 = scalar_lea.vmem [#allocation10], %s447
        // Predicated region
        $region65: #{tpu_custom_call.1} parent=51 // pred_check
          %p449 = pneg %p167
        $region66: #{tpu_custom_call.1} parent=51 // pred_check_branch
          %451 = sbr.rel (%p449) target = $region68
        $region67: #{tpu_custom_call.1} parent=51 // pred_region
          %452 = dma.done %s445, 2304
        $region68: #{tpu_custom_call.1} parent=51 // pred_fallthru
          _
        // Predicated region
        $region69: #{tpu_custom_call.1} parent=51 // pred_check
          %p453 = pneg %p188
        $region70: #{tpu_custom_call.1} parent=51 // pred_check_branch
          %455 = sbr.rel (%p453) target = $region72
        $region71: #{tpu_custom_call.1} parent=51 // pred_region
          %456 = dma.done [#allocation11], 3072
        $region72: #{tpu_custom_call.1} parent=51 // pred_fallthru
          _
        %s457 = sand.u32 %s56, 1
        %s458 = scalar_lea.sflag [#allocation5], %s457
        %s459 = sand.u32 %s56, 1
        %s460 = smul.addr %s459, 144
        %s461 = scalar_lea.vmem [#allocation4], %s460
        %p462 = pneg %p69
        %p463 = pneg %p66
        %p464 = pneg %p90
        %p465 = pneg %p87
        %p466 = pneg %p111
        %p467 = pneg %p108
        %p468 = pneg %p137
        %p469 = pneg %p134
        %s470 = sand.u32 %s34, 1
        %s471 = scalar_lea.sflag [#allocation11], %s470
        %s472 = sand.u32 %s154, 1
        %s473 = smul.addr %s472, 144
        %s474 = scalar_lea.vmem [#allocation10], %s473
        %p475 = pneg %p167
        %p476 = pneg %p164
        %p477 = pneg %p188
        %p478 = pneg %p185
        %p479 = pneg %p209
        %p480 = pneg %p206
        %s481 = smul.u32 2, %s38
        %p482 = scmp.lt.s32.totalorder %s481, 1
        %s483 = scalar_select %p482, %s481, 1
        %s484 = smul.addr %s483, 8
        %s485 = scalar_lea.vmem %s7, %s484
        %p486 = pneg %p235
        %p487 = pneg %p232
        %p488 = pneg %p263
        %p489 = pneg %p260
        %s490 = sand.u32 %s250, 1
        %s491 = scalar_lea.sflag [#allocation6], %s490
        %s492 = sand.u32 %s250, 1
        %s493 = smul.addr %s492, 48
        %s494 = scalar_lea.vmem [#allocation13], %s493
        %p495 = pneg %p293
        %p496 = pneg %p290
        %s497 = sand.u32 %s280, 1
        %s498 = scalar_lea.sflag [#allocation15], %s497
        %s499 = sand.u32 %s280, 1
        %s500 = smul.addr %s499, 48
        %s501 = scalar_lea.vmem [#allocation14], %s500
        %s502 = smul.u32 3, %s39
        %s503 = smul.u32 2, %s38
        %s504 = smul.u32 2, %s38
        %s505 = ssub.s32 2, %s39
        %s506 = smul.u32 3, %s505
        %s507 = smul.u32 2, %s38
        %s508 = smul.u32 2, %s38
        %p509 = scmp.lt.s32.totalorder %s508, 1
        %s510 = scalar_select %p509, %s508, 1
        %s511 = smul.addr %s510, 8
        %s512 = scalar_lea.vmem %s7, %s511
        %s513 = smul.u32 2, %s38
        %s514 = smul.u32 3, %s39
        %s515 = smul.u32 2, %s38
        %s516 = ssub.s32 2, %s39
        %s517 = smul.u32 3, %s516
        %s518 = smul.u32 2, %s38
        %p520 = scmp.eq.s32.totalorder %s39, 0
        // Predicated region
        $region73: #{tpu_custom_call.1} parent=51 // pred_check
          %p521 = pneg %p520
        $region74: #{tpu_custom_call.1} parent=51 // pred_check_branch
          %523 = sbr.rel (%p521) target = $region76
        $region75: #{tpu_custom_call.1} parent=51 // pred_region
          %v524 = vld [vmem:[#allocation9] sm:$0xff]
          %v525 = vld [vmem:[#allocation9 + $0x8] sm:$0xff]
          %526 = vst [vmem:[#allocation2] sm:$0xff] %v524
          %527 = vst [vmem:[#allocation2 + $0x8] sm:$0xff] %v525
          %v528 = vld [vmem:[%s512] sm:$0xff]
          %v529 = vld [vmem:[%s512 + $0x8] sm:$0xff]
          %530 = vst [vmem:[#allocation3] sm:$0xff] %v528
          %531 = vst [vmem:[#allocation3 + $0x8] sm:$0xff] %v529
        $region76: #{tpu_custom_call.1} parent=51 // pred_fallthru
          _
        %v532 = vld [vmem:[#allocation7] sm:$0xff]
        %v533 = vld [vmem:[#allocation7 + $0x8] sm:$0xf]
        %v534 = vld [vmem:[#allocation7 + $0xc] sm:$0xff]
        %v535 = vld [vmem:[#allocation7 + $0x14] sm:$0xf]
        %v536 = vld [vmem:[#allocation7 + $0x18] sm:$0xff]
        %v537 = vld [vmem:[#allocation7 + $0x20] sm:$0xf]
        %v538 = vld [vmem:[#allocation7 + $0x24] sm:$0xff]
        %v539 = vld [vmem:[#allocation7 + $0x2c] sm:$0xf]
        %v540 = vld [vmem:[#allocation7 + $0x30] sm:$0xff]
        %v541 = vld [vmem:[#allocation7 + $0x38] sm:$0xf]
        %v542 = vld [vmem:[#allocation7 + $0x3c] sm:$0xff]
        %v543 = vld [vmem:[#allocation7 + $0x44] sm:$0xf]
        %v544 = vld [vmem:[#allocation7 + $0x48] sm:$0xff]
        %v545 = vld [vmem:[#allocation7 + $0x50] sm:$0xf]
        %v546 = vld [vmem:[#allocation7 + $0x54] sm:$0xff]
        %v547 = vld [vmem:[#allocation7 + $0x5c] sm:$0xf]
        %v548 = vld [vmem:[#allocation7 + $0x60] sm:$0xff]
        %v549 = vld [vmem:[#allocation7 + $0x68] sm:$0xf]
        %v550 = vld [vmem:[#allocation7 + $0x6c] sm:$0xff]
        %v551 = vld [vmem:[#allocation7 + $0x74] sm:$0xf]
        %v552 = vld [vmem:[#allocation7 + $0x78] sm:$0xff]
        %v553 = vld [vmem:[#allocation7 + $0x80] sm:$0xf]
        %v554 = vld [vmem:[#allocation7 + $0x84] sm:$0xff]
        %v555 = vld [vmem:[#allocation7 + $0x8c] sm:$0xf]
        %v556 = vld [vmem:[#allocation7 + $0x90] sm:$0xff]
        %v557 = vld [vmem:[#allocation7 + $0x98] sm:$0xf]
        %v558 = vld [vmem:[#allocation7 + $0x9c] sm:$0xff]
        %v559 = vld [vmem:[#allocation7 + $0xa4] sm:$0xf]
        %v560 = vld [vmem:[#allocation7 + $0xa8] sm:$0xff]
        %v561 = vld [vmem:[#allocation7 + $0xb0] sm:$0xf]
        %v562 = vld [vmem:[#allocation7 + $0xb4] sm:$0xff]
        %v563 = vld [vmem:[#allocation7 + $0xbc] sm:$0xf]
        %v564 = vld [vmem:[#allocation12] sm:$0xff]
        %v565 = vld [vmem:[#allocation12 + $0x8] sm:$0xf]
        %v566 = vld [vmem:[#allocation12 + $0xc] sm:$0xff]
        %v567 = vld [vmem:[#allocation12 + $0x14] sm:$0xf]
        %v568 = vld [vmem:[#allocation12 + $0x18] sm:$0xff]
        %v569 = vld [vmem:[#allocation12 + $0x20] sm:$0xf]
        %v570 = vld [vmem:[#allocation12 + $0x24] sm:$0xff]
        %v571 = vld [vmem:[#allocation12 + $0x2c] sm:$0xf]
        %v572 = vld [vmem:[#allocation12 + $0x30] sm:$0xff]
        %v573 = vld [vmem:[#allocation12 + $0x38] sm:$0xf]
        %v574 = vld [vmem:[#allocation12 + $0x3c] sm:$0xff]
        %v575 = vld [vmem:[#allocation12 + $0x44] sm:$0xf]
        %v576 = vld [vmem:[#allocation12 + $0x48] sm:$0xff]
        %v577 = vld [vmem:[#allocation12 + $0x50] sm:$0xf]
        %v578 = vld [vmem:[#allocation12 + $0x54] sm:$0xff]
        %v579 = vld [vmem:[#allocation12 + $0x5c] sm:$0xf]
        %v580 = vld [vmem:[#allocation12 + $0x60] sm:$0xff]
        %v581 = vld [vmem:[#allocation12 + $0x68] sm:$0xf]
        %v582 = vld [vmem:[#allocation12 + $0x6c] sm:$0xff]
        %v583 = vld [vmem:[#allocation12 + $0x74] sm:$0xf]
        %v584 = vld [vmem:[#allocation12 + $0x78] sm:$0xff]
        %v585 = vld [vmem:[#allocation12 + $0x80] sm:$0xf]
        %v586 = vld [vmem:[#allocation12 + $0x84] sm:$0xff]
        %v587 = vld [vmem:[#allocation12 + $0x8c] sm:$0xf]
        %v588 = vld [vmem:[#allocation12 + $0x90] sm:$0xff]
        %v589 = vld [vmem:[#allocation12 + $0x98] sm:$0xf]
        %v590 = vld [vmem:[#allocation12 + $0x9c] sm:$0xff]
        %v591 = vld [vmem:[#allocation12 + $0xa4] sm:$0xf]
        %v592 = vld [vmem:[#allocation12 + $0xa8] sm:$0xff]
        %v593 = vld [vmem:[#allocation12 + $0xb0] sm:$0xf]
        %v594 = vld [vmem:[#allocation12 + $0xb4] sm:$0xff]
        %v595 = vld [vmem:[#allocation12 + $0xbc] sm:$0xf]
        %v596 = vld [vmem:[%s2] sm:$0x1]
        %v597 = vld [vmem:[%s6] sm:$0x1]
        %v598 = vld [vmem:[#allocation2] sm:$0xff]
        %v599 = vld [vmem:[#allocation2 + $0x8] sm:$0xff]
        %v600 = vld [vmem:[#allocation3] sm:$0xff]
        %v601 = vld [vmem:[#allocation3 + $0x8] sm:$0xff]
        %v602 = vld [vmem:[%s431] sm:$0xff]
        %v603 = vld [vmem:[%s431 + $0x8] sm:$0xff]
        %v604 = vld [vmem:[%s431 + $0x10] sm:$0xff]
        %v605 = vld [vmem:[%s431 + $0x18] sm:$0xff]
        %v606 = vld [vmem:[%s431 + $0x20] sm:$0xff]
        %v607 = vld [vmem:[%s431 + $0x28] sm:$0xff]
        %v608 = vpack.c.bf16 %v599, %v598
        %v641 = vunpack.c.l.b16 %v532
        %v642 = vunpack.c.h.b16 %v532
        %v643 = vunpack.c.l.b16 %v533
        %v644 = vunpack.c.l.b16 %v534
        %v645 = vunpack.c.h.b16 %v534
        %v646 = vunpack.c.l.b16 %v535
        %v647 = vunpack.c.l.b16 %v536
        %v648 = vunpack.c.h.b16 %v536
        %v649 = vunpack.c.l.b16 %v537
        %v650 = vunpack.c.l.b16 %v538
        %v651 = vunpack.c.h.b16 %v538
        %v652 = vunpack.c.l.b16 %v539
        %v653 = vunpack.c.l.b16 %v540
        %v654 = vunpack.c.h.b16 %v540
        %v655 = vunpack.c.l.b16 %v541
        %v656 = vunpack.c.l.b16 %v542
        %v657 = vunpack.c.h.b16 %v542
        %v658 = vunpack.c.l.b16 %v543
        %v659 = vunpack.c.l.b16 %v544
        %v660 = vunpack.c.h.b16 %v544
        %v661 = vunpack.c.l.b16 %v545
        %v662 = vunpack.c.l.b16 %v546
        %v663 = vunpack.c.h.b16 %v546
        %v664 = vunpack.c.l.b16 %v547
        %v665 = vunpack.c.l.b16 %v548
        %v666 = vunpack.c.h.b16 %v548
        %v667 = vunpack.c.l.b16 %v549
        %v668 = vunpack.c.l.b16 %v550
        %v669 = vunpack.c.h.b16 %v550
        %v670 = vunpack.c.l.b16 %v551
        %v671 = vunpack.c.l.b16 %v552
        %v672 = vunpack.c.h.b16 %v552
        %v673 = vunpack.c.l.b16 %v553
        %v674 = vunpack.c.l.b16 %v554
        %v675 = vunpack.c.h.b16 %v554
        %v676 = vunpack.c.l.b16 %v555
        %v677 = vunpack.c.l.b16 %v556
        %v678 = vunpack.c.h.b16 %v556
        %v679 = vunpack.c.l.b16 %v557
        %v680 = vunpack.c.l.b16 %v558
        %v681 = vunpack.c.h.b16 %v558
        %v682 = vunpack.c.l.b16 %v559
        %v683 = vunpack.c.l.b16 %v560
        %v684 = vunpack.c.h.b16 %v560
        %v685 = vunpack.c.l.b16 %v561
        %v686 = vunpack.c.l.b16 %v562
        %v687 = vunpack.c.h.b16 %v562
        %v688 = vunpack.c.l.b16 %v563
        %v689 = vpack.c.b16 %v644, %v641
        %v690 = vpack.c.b16 %v645, %v642
        %v691 = vpack.c.b16 %v646, %v643
        %v692 = vpack.c.b16 %v650, %v647
        %v693 = vpack.c.b16 %v651, %v648
        %v694 = vpack.c.b16 %v652, %v649
        %v695 = vpack.c.b16 %v656, %v653
        %v696 = vpack.c.b16 %v657, %v654
        %v697 = vpack.c.b16 %v658, %v655
        %v698 = vpack.c.b16 %v662, %v659
        %v699 = vpack.c.b16 %v663, %v660
        %v700 = vpack.c.b16 %v664, %v661
        %v701 = vpack.c.b16 %v668, %v665
        %v702 = vpack.c.b16 %v669, %v666
        %v703 = vpack.c.b16 %v670, %v667
        %v704 = vpack.c.b16 %v674, %v671
        %v705 = vpack.c.b16 %v675, %v672
        %v706 = vpack.c.b16 %v676, %v673
        %v707 = vpack.c.b16 %v680, %v677
        %v708 = vpack.c.b16 %v681, %v678
        %v709 = vpack.c.b16 %v682, %v679
        %v710 = vpack.c.b16 %v686, %v683
        %v711 = vpack.c.b16 %v687, %v684
        %v712 = vpack.c.b16 %v688, %v685
        %737 = vmatprep.subr.bf16.mxu0 %v690
        %738 = vmatpush1.bf16.msra.mxu0 %v689
        %739 = vmatprep.subr.bf16.mxu0 %v693
        %740 = vmatpush1.bf16.msra.mxu0 %v692
        %741 = vmatprep.subr.bf16.mxu0 %v696
        %742 = vmatpush1.bf16.msra.mxu0 %v695
        %743 = vmatprep.subr.bf16.mxu0 %v699
        %744 = vmatpush1.bf16.msra.mxu0 %v698
        %745 = vmatprep.subr.bf16.mxu0 %v702
        %746 = vmatpush1.bf16.msra.mxu0 %v701
        %747 = vmatprep.subr.bf16.mxu0 %v705
        %748 = vmatpush1.bf16.msra.mxu0 %v704
        %749 = vmatprep.subr.bf16.mxu0 %v708
        %750 = vmatpush1.bf16.msra.mxu0 %v707
        %751 = vmatprep.subr.bf16.mxu0 %v711
        %752 = vmatpush1.bf16.msra.mxu0 %v710
        %753 = vmatprep.subr.bf16.mxu0 0
        %754 = vmatpush1.bf16.msra.mxu0 0
        %755 = vmatprep.subr.bf16.mxu0 0
        %756 = vmatpush1.bf16.msra.mxu0 0
        %757 = vmatprep.subr.bf16.mxu0 0
        %758 = vmatpush1.bf16.msra.mxu0 0
        %759 = vmatprep.subr.bf16.mxu0 0
        %760 = vmatpush1.bf16.msra.mxu0 0
        %761 = vmatprep.subr.bf16.mxu0 0
        %762 = vmatpush1.bf16.msra.mxu0 0
        %763 = vmatprep.subr.bf16.mxu0 0
        %764 = vmatpush1.bf16.msra.mxu0 0
        %765 = vmatprep.subr.bf16.mxu0 0
        %766 = vmatpush1.bf16.msra.mxu0 0
        %767 = vmatprep.subr.bf16.mxu0 0
        %768 = vmatpush1.bf16.msra.mxu0 0
        %769 = vmatprep.mubr.bf16.mxu0 0
        %770 = vmatmul.mubr.bf16.gmra.mrb[0].mxu0 %v608
        %v771 = vpop.f32.mrb[0].mxu0
        %v772 = vadd.f32 0.0, %v771
        %v773 = vpop.f32.mrb[0].mxu0
        %v774 = vadd.f32 0.0, %v773
        %v775 = vpop.f32.mrb[0].mxu0
        %v776 = vadd.f32 0.0, %v775
        %v777 = vpop.f32.mrb[0].mxu0
        %v778 = vadd.f32 0.0, %v777
        %779 = vdwg.mxu0
        %780 = vmatprep.subr.bf16.mxu0 0
        %781 = vmatpush1.bf16.msra.mxu0 %v691
        %782 = vmatprep.subr.bf16.mxu0 0
        %783 = vmatpush1.bf16.msra.mxu0 %v694
        %784 = vmatprep.subr.bf16.mxu0 0
        %785 = vmatpush1.bf16.msra.mxu0 %v697
        %786 = vmatprep.subr.bf16.mxu0 0
        %787 = vmatpush1.bf16.msra.mxu0 %v700
        %788 = vmatprep.subr.bf16.mxu0 0
        %789 = vmatpush1.bf16.msra.mxu0 %v703
        %790 = vmatprep.subr.bf16.mxu0 0
        %791 = vmatpush1.bf16.msra.mxu0 %v706
        %792 = vmatprep.subr.bf16.mxu0 0
        %793 = vmatpush1.bf16.msra.mxu0 %v709
        %794 = vmatprep.subr.bf16.mxu0 0
        %795 = vmatpush1.bf16.msra.mxu0 %v712
        %796 = vmatprep.subr.bf16.mxu0 0
        %797 = vmatpush1.bf16.msra.mxu0 0
        %798 = vmatprep.subr.bf16.mxu0 0
        %799 = vmatpush1.bf16.msra.mxu0 0
        %800 = vmatprep.subr.bf16.mxu0 0
        %801 = vmatpush1.bf16.msra.mxu0 0
        %802 = vmatprep.subr.bf16.mxu0 0
        %803 = vmatpush1.bf16.msra.mxu0 0
        %804 = vmatprep.subr.bf16.mxu0 0
        %805 = vmatpush1.bf16.msra.mxu0 0
        %806 = vmatprep.subr.bf16.mxu0 0
        %807 = vmatpush1.bf16.msra.mxu0 0
        %808 = vmatprep.subr.bf16.mxu0 0
        %809 = vmatpush1.bf16.msra.mxu0 0
        %810 = vmatprep.subr.bf16.mxu0 0
        %811 = vmatpush1.bf16.msra.mxu0 0
        %812 = vmatprep.mubr.bf16.mxu0 0
        %813 = vmatmul.mubr.bf16.gmra.mrb[0].mxu0 %v608
        %v814 = vpop.f32.mrb[0].mxu0
        %v815 = vadd.f32 0.0, %v814
        %v816 = vpop.f32.mrb[0].mxu0
        %v817 = vpop.f32.mrb[0].mxu0
        %v818 = vadd.f32 0.0, %v817
        %v819 = vpop.f32.mrb[0].mxu0
        %820 = vdwg.mxu0
        %v821 = vadd.f32 %v602, %v772
        %v822 = vadd.f32 %v605, %v776
        %v823 = vmul.f32 %v821, 0.5
        %v824 = vmul.f32 %v822, 0.5
        %v825 = vtanh.pop %v823
        %v826 = vtanh.pop %v824
        %v827 = vmul.f32 %v825, 0.5
        %v828 = vmul.f32 %v826, 0.5
        %v829 = vadd.f32 %v827, 0.5
        %v830 = vadd.f32 %v828, 0.5
        %v831 = vadd.f32 %v603, %v774
        %v832 = vadd.f32 %v606, %v778
        %v833 = vmul.f32 %v831, 0.5
        %v834 = vmul.f32 %v832, 0.5
        %v835 = vtanh.pop %v833
        %v836 = vtanh.pop %v834
        %v837 = vmul.f32 %v835, 0.5
        %v838 = vmul.f32 %v836, 0.5
        %v839 = vadd.f32 %v837, 0.5
        %v840 = vadd.f32 %v838, 0.5
        %v842 = vlaneseq
        %v843 = vshrl.u32 %v842, 7
        %v844 = vsub.s32 0, %v843
        %v845 = vrot.slane %v596, %v844
        %v847 = vadd.f32 %v815, %v845
        %v848 = vadd.f32 %v818, %v845
        %v849 = vmul.f32 %v829, %v847
        %v850 = vmul.f32 %v830, %v848
        %v851 = vadd.f32 %v604, %v849
        %v852 = vadd.f32 %v607, %v850
        %v853 = vtanh.pop %v851
        %v854 = vtanh.pop %v852
        %v855 = vsub.f32 %v598, %v853
        %v856 = vsub.f32 %v599, %v854
        %v857 = vmul.f32 %v839, %v855
        %v858 = vmul.f32 %v840, %v856
        %v859 = vadd.f32 %v853, %v857
        %v860 = vadd.f32 %v854, %v858
        %s861 = smul.u32 %s39, 3
        %p862 = scmp.lt.s32.totalorder %s861, 8
        %s863 = scalar_select %p862, 1, 0
        %v864 = vstv %s863
        %vm865 = vcmp.eq.s32.totalorder %v864, 1
        %v866 = vsel %vm865, %v859, %v598
        %v867 = vsel %vm865, %v860, %v599
        %868 = vst [vmem:[%s494] sm:$0xff] %v866
        %869 = vst [vmem:[%s494 + $0x8] sm:$0xff] %v867
        %s870 = scalar_lea.vmem %s448, 96 [#allocation10]
        %v871 = vld [vmem:[%s870] sm:$0xff]
        %v872 = vld [vmem:[%s870 + $0x8] sm:$0xff]
        %v873 = vld [vmem:[%s870 + $0x10] sm:$0xff]
        %v874 = vld [vmem:[%s870 + $0x18] sm:$0xff]
        %v875 = vld [vmem:[%s870 + $0x20] sm:$0xff]
        %v876 = vld [vmem:[%s870 + $0x28] sm:$0xff]
        %v877 = vpack.c.bf16 %v601, %v600
        %v910 = vunpack.c.l.b16 %v564
        %v911 = vunpack.c.h.b16 %v564
        %v912 = vunpack.c.l.b16 %v565
        %v913 = vunpack.c.l.b16 %v566
        %v914 = vunpack.c.h.b16 %v566
        %v915 = vunpack.c.l.b16 %v567
        %v916 = vunpack.c.l.b16 %v568
        %v917 = vunpack.c.h.b16 %v568
        %v918 = vunpack.c.l.b16 %v569
        %v919 = vunpack.c.l.b16 %v570
        %v920 = vunpack.c.h.b16 %v570
        %v921 = vunpack.c.l.b16 %v571
        %v922 = vunpack.c.l.b16 %v572
        %v923 = vunpack.c.h.b16 %v572
        %v924 = vunpack.c.l.b16 %v573
        %v925 = vunpack.c.l.b16 %v574
        %v926 = vunpack.c.h.b16 %v574
        %v927 = vunpack.c.l.b16 %v575
        %v928 = vunpack.c.l.b16 %v576
        %v929 = vunpack.c.h.b16 %v576
        %v930 = vunpack.c.l.b16 %v577
        %v931 = vunpack.c.l.b16 %v578
        %v932 = vunpack.c.h.b16 %v578
        %v933 = vunpack.c.l.b16 %v579
        %v934 = vunpack.c.l.b16 %v580
        %v935 = vunpack.c.h.b16 %v580
        %v936 = vunpack.c.l.b16 %v581
        %v937 = vunpack.c.l.b16 %v582
        %v938 = vunpack.c.h.b16 %v582
        %v939 = vunpack.c.l.b16 %v583
        %v940 = vunpack.c.l.b16 %v584
        %v941 = vunpack.c.h.b16 %v584
        %v942 = vunpack.c.l.b16 %v585
        %v943 = vunpack.c.l.b16 %v586
        %v944 = vunpack.c.h.b16 %v586
        %v945 = vunpack.c.l.b16 %v587
        %v946 = vunpack.c.l.b16 %v588
        %v947 = vunpack.c.h.b16 %v588
        %v948 = vunpack.c.l.b16 %v589
        %v949 = vunpack.c.l.b16 %v590
        %v950 = vunpack.c.h.b16 %v590
        %v951 = vunpack.c.l.b16 %v591
        %v952 = vunpack.c.l.b16 %v592
        %v953 = vunpack.c.h.b16 %v592
        %v954 = vunpack.c.l.b16 %v593
        %v955 = vunpack.c.l.b16 %v594
        %v956 = vunpack.c.h.b16 %v594
        %v957 = vunpack.c.l.b16 %v595
        %v958 = vpack.c.b16 %v913, %v910
        %v959 = vpack.c.b16 %v914, %v911
        %v960 = vpack.c.b16 %v915, %v912
        %v961 = vpack.c.b16 %v919, %v916
        %v962 = vpack.c.b16 %v920, %v917
        %v963 = vpack.c.b16 %v921, %v918
        %v964 = vpack.c.b16 %v925, %v922
        %v965 = vpack.c.b16 %v926, %v923
        %v966 = vpack.c.b16 %v927, %v924
        %v967 = vpack.c.b16 %v931, %v928
        %v968 = vpack.c.b16 %v932, %v929
        %v969 = vpack.c.b16 %v933, %v930
        %v970 = vpack.c.b16 %v937, %v934
        %v971 = vpack.c.b16 %v938, %v935
        %v972 = vpack.c.b16 %v939, %v936
        %v973 = vpack.c.b16 %v943, %v940
        %v974 = vpack.c.b16 %v944, %v941
        %v975 = vpack.c.b16 %v945, %v942
        %v976 = vpack.c.b16 %v949, %v946
        %v977 = vpack.c.b16 %v950, %v947
        %v978 = vpack.c.b16 %v951, %v948
        %v979 = vpack.c.b16 %v955, %v952
        %v980 = vpack.c.b16 %v956, %v953
        %v981 = vpack.c.b16 %v957, %v954
        %1006 = vmatprep.subr.bf16.mxu0 %v959
        %1007 = vmatpush1.bf16.msra.mxu0 %v958
        %1008 = vmatprep.subr.bf16.mxu0 %v962
        %1009 = vmatpush1.bf16.msra.mxu0 %v961
        %1010 = vmatprep.subr.bf16.mxu0 %v965
        %1011 = vmatpush1.bf16.msra.mxu0 %v964
        %1012 = vmatprep.subr.bf16.mxu0 %v968
        %1013 = vmatpush1.bf16.msra.mxu0 %v967
        %1014 = vmatprep.subr.bf16.mxu0 %v971
        %1015 = vmatpush1.bf16.msra.mxu0 %v970
        %1016 = vmatprep.subr.bf16.mxu0 %v974
        %1017 = vmatpush1.bf16.msra.mxu0 %v973
        %1018 = vmatprep.subr.bf16.mxu0 %v977
        %1019 = vmatpush1.bf16.msra.mxu0 %v976
        %1020 = vmatprep.subr.bf16.mxu0 %v980
        %1021 = vmatpush1.bf16.msra.mxu0 %v979
        %1022 = vmatprep.subr.bf16.mxu0 0
        %1023 = vmatpush1.bf16.msra.mxu0 0
        %1024 = vmatprep.subr.bf16.mxu0 0
        %1025 = vmatpush1.bf16.msra.mxu0 0
        %1026 = vmatprep.subr.bf16.mxu0 0
        %1027 = vmatpush1.bf16.msra.mxu0 0
        %1028 = vmatprep.subr.bf16.mxu0 0
        %1029 = vmatpush1.bf16.msra.mxu0 0
        %1030 = vmatprep.subr.bf16.mxu0 0
        %1031 = vmatpush1.bf16.msra.mxu0 0
        %1032 = vmatprep.subr.bf16.mxu0 0
        %1033 = vmatpush1.bf16.msra.mxu0 0
        %1034 = vmatprep.subr.bf16.mxu0 0
        %1035 = vmatpush1.bf16.msra.mxu0 0
        %1036 = vmatprep.subr.bf16.mxu0 0
        %1037 = vmatpush1.bf16.msra.mxu0 0
        %1038 = vmatprep.mubr.bf16.mxu0 0
        %1039 = vmatmul.mubr.bf16.gmra.mrb[0].mxu0 %v877
        %v1040 = vpop.f32.mrb[0].mxu0
        %v1041 = vadd.f32 0.0, %v1040
        %v1042 = vpop.f32.mrb[0].mxu0
        %v1043 = vadd.f32 0.0, %v1042
        %v1044 = vpop.f32.mrb[0].mxu0
        %v1045 = vadd.f32 0.0, %v1044
        %v1046 = vpop.f32.mrb[0].mxu0
        %v1047 = vadd.f32 0.0, %v1046
        %1048 = vdwg.mxu0
        %1049 = vmatprep.subr.bf16.mxu0 0
        %1050 = vmatpush1.bf16.msra.mxu0 %v960
        %1051 = vmatprep.subr.bf16.mxu0 0
        %1052 = vmatpush1.bf16.msra.mxu0 %v963
        %1053 = vmatprep.subr.bf16.mxu0 0
        %1054 = vmatpush1.bf16.msra.mxu0 %v966
        %1055 = vmatprep.subr.bf16.mxu0 0
        %1056 = vmatpush1.bf16.msra.mxu0 %v969
        %1057 = vmatprep.subr.bf16.mxu0 0
        %1058 = vmatpush1.bf16.msra.mxu0 %v972
        %1059 = vmatprep.subr.bf16.mxu0 0
        %1060 = vmatpush1.bf16.msra.mxu0 %v975
        %1061 = vmatprep.subr.bf16.mxu0 0
        %1062 = vmatpush1.bf16.msra.mxu0 %v978
        %1063 = vmatprep.subr.bf16.mxu0 0
        %1064 = vmatpush1.bf16.msra.mxu0 %v981
        %1065 = vmatprep.subr.bf16.mxu0 0
        %1066 = vmatpush1.bf16.msra.mxu0 0
        %1067 = vmatprep.subr.bf16.mxu0 0
        %1068 = vmatpush1.bf16.msra.mxu0 0
        %1069 = vmatprep.subr.bf16.mxu0 0
        %1070 = vmatpush1.bf16.msra.mxu0 0
        %1071 = vmatprep.subr.bf16.mxu0 0
        %1072 = vmatpush1.bf16.msra.mxu0 0
        %1073 = vmatprep.subr.bf16.mxu0 0
        %1074 = vmatpush1.bf16.msra.mxu0 0
        %1075 = vmatprep.subr.bf16.mxu0 0
        %1076 = vmatpush1.bf16.msra.mxu0 0
        %1077 = vmatprep.subr.bf16.mxu0 0
        %1078 = vmatpush1.bf16.msra.mxu0 0
        %1079 = vmatprep.subr.bf16.mxu0 0
        %1080 = vmatpush1.bf16.msra.mxu0 0
        %1081 = vmatprep.mubr.bf16.mxu0 0
        %1082 = vmatmul.mubr.bf16.gmra.mrb[0].mxu0 %v877
        %v1083 = vpop.f32.mrb[0].mxu0
        %v1084 = vadd.f32 0.0, %v1083
        %v1085 = vpop.f32.mrb[0].mxu0
        %v1086 = vpop.f32.mrb[0].mxu0
        %v1087 = vadd.f32 0.0, %v1086
        %v1088 = vpop.f32.mrb[0].mxu0
        %1089 = vdwg.mxu0
        %v1090 = vadd.f32 %v871, %v1041
        %v1091 = vadd.f32 %v874, %v1045
        %v1092 = vmul.f32 %v1090, 0.5
        %v1093 = vmul.f32 %v1091, 0.5
        %v1094 = vtanh.pop %v1092
        %v1095 = vtanh.pop %v1093
        %v1096 = vmul.f32 %v1094, 0.5
        %v1097 = vmul.f32 %v1095, 0.5
        %v1098 = vadd.f32 %v1096, 0.5
        %v1099 = vadd.f32 %v1097, 0.5
        %v1100 = vadd.f32 %v872, %v1043
        %v1101 = vadd.f32 %v875, %v1047
        %v1102 = vmul.f32 %v1100, 0.5
        %v1103 = vmul.f32 %v1101, 0.5
        %v1104 = vtanh.pop %v1102
        %v1105 = vtanh.pop %v1103
        %v1106 = vmul.f32 %v1104, 0.5
        %v1107 = vmul.f32 %v1105, 0.5
        %v1108 = vadd.f32 %v1106, 0.5
        %v1109 = vadd.f32 %v1107, 0.5
        %v1111 = vlaneseq
        %v1112 = vshrl.u32 %v1111, 7
        %v1113 = vsub.s32 0, %v1112
        %v1114 = vrot.slane %v597, %v1113
        %v1116 = vadd.f32 %v1084, %v1114
        %v1117 = vadd.f32 %v1087, %v1114
        %v1118 = vmul.f32 %v1098, %v1116
        %v1119 = vmul.f32 %v1099, %v1117
        %v1120 = vadd.f32 %v873, %v1118
        %v1121 = vadd.f32 %v876, %v1119
        %v1122 = vtanh.pop %v1120
        %v1123 = vtanh.pop %v1121
        %v1124 = vsub.f32 %v600, %v1122
        %v1125 = vsub.f32 %v601, %v1123
        %v1126 = vmul.f32 %v1108, %v1124
        %v1127 = vmul.f32 %v1109, %v1125
        %v1128 = vadd.f32 %v1122, %v1126
        %v1129 = vadd.f32 %v1123, %v1127
        %s1130 = ssub.s32 2, %s39
        %s1131 = smul.u32 %s1130, 3
        %s1132 = sadd.s32 %s1131, 2
        %p1133 = scmp.lt.s32.totalorder %s1132, 8
        %s1134 = scalar_select %p1133, 1, 0
        %v1135 = vstv %s1134
        %vm1136 = vcmp.eq.s32.totalorder %v1135, 1
        %v1137 = vsel %vm1136, %v1128, %v600
        %v1138 = vsel %vm1136, %v1129, %v601
        %s1139 = scalar_lea.vmem %s501, 32 [#allocation14]
        %1140 = vst [vmem:[%s1139] sm:$0xff] %v1137
        %1141 = vst [vmem:[%s1139 + $0x8] sm:$0xff] %v1138
        %s1142 = scalar_lea.vmem %s431, 48 [#allocation4]
        %v1143 = vld [vmem:[%s1142] sm:$0xff]
        %v1144 = vld [vmem:[%s1142 + $0x8] sm:$0xff]
        %v1145 = vld [vmem:[%s1142 + $0x10] sm:$0xff]
        %v1146 = vld [vmem:[%s1142 + $0x18] sm:$0xff]
        %v1147 = vld [vmem:[%s1142 + $0x20] sm:$0xff]
        %v1148 = vld [vmem:[%s1142 + $0x28] sm:$0xff]
        %v1149 = vpack.c.bf16 %v867, %v866
        %1150 = vmatprep.subr.bf16.mxu0 %v690
        %1151 = vmatpush1.bf16.msra.mxu0 %v689
        %1152 = vmatprep.subr.bf16.mxu0 %v693
        %1153 = vmatpush1.bf16.msra.mxu0 %v692
        %1154 = vmatprep.subr.bf16.mxu0 %v696
        %1155 = vmatpush1.bf16.msra.mxu0 %v695
        %1156 = vmatprep.subr.bf16.mxu0 %v699
        %1157 = vmatpush1.bf16.msra.mxu0 %v698
        %1158 = vmatprep.subr.bf16.mxu0 %v702
        %1159 = vmatpush1.bf16.msra.mxu0 %v701
        %1160 = vmatprep.subr.bf16.mxu0 %v705
        %1161 = vmatpush1.bf16.msra.mxu0 %v704
        %1162 = vmatprep.subr.bf16.mxu0 %v708
        %1163 = vmatpush1.bf16.msra.mxu0 %v707
        %1164 = vmatprep.subr.bf16.mxu0 %v711
        %1165 = vmatpush1.bf16.msra.mxu0 %v710
        %1166 = vmatprep.subr.bf16.mxu0 0
        %1167 = vmatpush1.bf16.msra.mxu0 0
        %1168 = vmatprep.subr.bf16.mxu0 0
        %1169 = vmatpush1.bf16.msra.mxu0 0
        %1170 = vmatprep.subr.bf16.mxu0 0
        %1171 = vmatpush1.bf16.msra.mxu0 0
        %1172 = vmatprep.subr.bf16.mxu0 0
        %1173 = vmatpush1.bf16.msra.mxu0 0
        %1174 = vmatprep.subr.bf16.mxu0 0
        %1175 = vmatpush1.bf16.msra.mxu0 0
        %1176 = vmatprep.subr.bf16.mxu0 0
        %1177 = vmatpush1.bf16.msra.mxu0 0
        %1178 = vmatprep.subr.bf16.mxu0 0
        %1179 = vmatpush1.bf16.msra.mxu0 0
        %1180 = vmatprep.subr.bf16.mxu0 0
        %1181 = vmatpush1.bf16.msra.mxu0 0
        %1182 = vmatprep.mubr.bf16.mxu0 0
        %1183 = vmatmul.mubr.bf16.gmra.mrb[0].mxu0 %v1149
        %v1184 = vpop.f32.mrb[0].mxu0
        %v1185 = vadd.f32 0.0, %v1184
        %v1186 = vpop.f32.mrb[0].mxu0
        %v1187 = vadd.f32 0.0, %v1186
        %v1188 = vpop.f32.mrb[0].mxu0
        %v1189 = vadd.f32 0.0, %v1188
        %v1190 = vpop.f32.mrb[0].mxu0
        %v1191 = vadd.f32 0.0, %v1190
        %1192 = vdwg.mxu0
        %1193 = vmatprep.subr.bf16.mxu0 0
        %1194 = vmatpush1.bf16.msra.mxu0 %v691
        %1195 = vmatprep.subr.bf16.mxu0 0
        %1196 = vmatpush1.bf16.msra.mxu0 %v694
        %1197 = vmatprep.subr.bf16.mxu0 0
        %1198 = vmatpush1.bf16.msra.mxu0 %v697
        %1199 = vmatprep.subr.bf16.mxu0 0
        %1200 = vmatpush1.bf16.msra.mxu0 %v700
        %1201 = vmatprep.subr.bf16.mxu0 0
        %1202 = vmatpush1.bf16.msra.mxu0 %v703
        %1203 = vmatprep.subr.bf16.mxu0 0
        %1204 = vmatpush1.bf16.msra.mxu0 %v706
        %1205 = vmatprep.subr.bf16.mxu0 0
        %1206 = vmatpush1.bf16.msra.mxu0 %v709
        %1207 = vmatprep.subr.bf16.mxu0 0
        %1208 = vmatpush1.bf16.msra.mxu0 %v712
        %1209 = vmatprep.subr.bf16.mxu0 0
        %1210 = vmatpush1.bf16.msra.mxu0 0
        %1211 = vmatprep.subr.bf16.mxu0 0
        %1212 = vmatpush1.bf16.msra.mxu0 0
        %1213 = vmatprep.subr.bf16.mxu0 0
        %1214 = vmatpush1.bf16.msra.mxu0 0
        %1215 = vmatprep.subr.bf16.mxu0 0
        %1216 = vmatpush1.bf16.msra.mxu0 0
        %1217 = vmatprep.subr.bf16.mxu0 0
        %1218 = vmatpush1.bf16.msra.mxu0 0
        %1219 = vmatprep.subr.bf16.mxu0 0
        %1220 = vmatpush1.bf16.msra.mxu0 0
        %1221 = vmatprep.subr.bf16.mxu0 0
        %1222 = vmatpush1.bf16.msra.mxu0 0
        %1223 = vmatprep.subr.bf16.mxu0 0
        %1224 = vmatpush1.bf16.msra.mxu0 0
        %1225 = vmatprep.mubr.bf16.mxu0 0
        %1226 = vmatmul.mubr.bf16.gmra.mrb[0].mxu0 %v1149
        %v1227 = vpop.f32.mrb[0].mxu0
        %v1228 = vadd.f32 0.0, %v1227
        %v1229 = vpop.f32.mrb[0].mxu0
        %v1230 = vpop.f32.mrb[0].mxu0
        %v1231 = vadd.f32 0.0, %v1230
        %v1232 = vpop.f32.mrb[0].mxu0
        %1233 = vdwg.mxu0
        %v1234 = vadd.f32 %v1143, %v1185
        %v1235 = vadd.f32 %v1146, %v1189
        %v1236 = vmul.f32 %v1234, 0.5
        %v1237 = vmul.f32 %v1235, 0.5
        %v1238 = vtanh.pop %v1236
        %v1239 = vtanh.pop %v1237
        %v1240 = vmul.f32 %v1238, 0.5
        %v1241 = vmul.f32 %v1239, 0.5
        %v1242 = vadd.f32 %v1240, 0.5
        %v1243 = vadd.f32 %v1241, 0.5
        %v1244 = vadd.f32 %v1144, %v1187
        %v1245 = vadd.f32 %v1147, %v1191
        %v1246 = vmul.f32 %v1244, 0.5
        %v1247 = vmul.f32 %v1245, 0.5
        %v1248 = vtanh.pop %v1246
        %v1249 = vtanh.pop %v1247
        %v1250 = vmul.f32 %v1248, 0.5
        %v1251 = vmul.f32 %v1249, 0.5
        %v1252 = vadd.f32 %v1250, 0.5
        %v1253 = vadd.f32 %v1251, 0.5
        %v1254 = vadd.f32 %v1228, %v845
        %v1255 = vadd.f32 %v1231, %v845
        %v1256 = vmul.f32 %v1242, %v1254
        %v1257 = vmul.f32 %v1243, %v1255
        %v1258 = vadd.f32 %v1145, %v1256
        %v1259 = vadd.f32 %v1148, %v1257
        %v1260 = vtanh.pop %v1258
        %v1261 = vtanh.pop %v1259
        %v1262 = vsub.f32 %v866, %v1260
        %v1263 = vsub.f32 %v867, %v1261
        %v1264 = vmul.f32 %v1252, %v1262
        %v1265 = vmul.f32 %v1253, %v1263
        %v1266 = vadd.f32 %v1260, %v1264
        %v1267 = vadd.f32 %v1261, %v1265
        %s1268 = sadd.s32 %s861, 1
        %p1269 = scmp.lt.s32.totalorder %s1268, 8
        %s1270 = scalar_select %p1269, 1, 0
        %v1271 = vstv %s1270
        %vm1272 = vcmp.eq.s32.totalorder %v1271, 1
        %v1273 = vsel %vm1272, %v1266, %v866
        %v1274 = vsel %vm1272, %v1267, %v867
        %s1275 = scalar_lea.vmem %s494, 16 [#allocation13]
        %1276 = vst [vmem:[%s1275] sm:$0xff] %v1273
        %1277 = vst [vmem:[%s1275 + $0x8] sm:$0xff] %v1274
        %s1278 = scalar_lea.vmem %s448, 48 [#allocation10]
        %v1279 = vld [vmem:[%s1278] sm:$0xff]
        %v1280 = vld [vmem:[%s1278 + $0x8] sm:$0xff]
        %v1281 = vld [vmem:[%s1278 + $0x10] sm:$0xff]
        %v1282 = vld [vmem:[%s1278 + $0x18] sm:$0xff]
        %v1283 = vld [vmem:[%s1278 + $0x20] sm:$0xff]
        %v1284 = vld [vmem:[%s1278 + $0x28] sm:$0xff]
        %v1285 = vpack.c.bf16 %v1138, %v1137
        %1286 = vmatprep.subr.bf16.mxu0 %v959
        %1287 = vmatpush1.bf16.msra.mxu0 %v958
        %1288 = vmatprep.subr.bf16.mxu0 %v962
        %1289 = vmatpush1.bf16.msra.mxu0 %v961
        %1290 = vmatprep.subr.bf16.mxu0 %v965
        %1291 = vmatpush1.bf16.msra.mxu0 %v964
        %1292 = vmatprep.subr.bf16.mxu0 %v968
        %1293 = vmatpush1.bf16.msra.mxu0 %v967
        %1294 = vmatprep.subr.bf16.mxu0 %v971
        %1295 = vmatpush1.bf16.msra.mxu0 %v970
        %1296 = vmatprep.subr.bf16.mxu0 %v974
        %1297 = vmatpush1.bf16.msra.mxu0 %v973
        %1298 = vmatprep.subr.bf16.mxu0 %v977
        %1299 = vmatpush1.bf16.msra.mxu0 %v976
        %1300 = vmatprep.subr.bf16.mxu0 %v980
        %1301 = vmatpush1.bf16.msra.mxu0 %v979
        %1302 = vmatprep.subr.bf16.mxu0 0
        %1303 = vmatpush1.bf16.msra.mxu0 0
        %1304 = vmatprep.subr.bf16.mxu0 0
        %1305 = vmatpush1.bf16.msra.mxu0 0
        %1306 = vmatprep.subr.bf16.mxu0 0
        %1307 = vmatpush1.bf16.msra.mxu0 0
        %1308 = vmatprep.subr.bf16.mxu0 0
        %1309 = vmatpush1.bf16.msra.mxu0 0
        %1310 = vmatprep.subr.bf16.mxu0 0
        %1311 = vmatpush1.bf16.msra.mxu0 0
        %1312 = vmatprep.subr.bf16.mxu0 0
        %1313 = vmatpush1.bf16.msra.mxu0 0
        %1314 = vmatprep.subr.bf16.mxu0 0
        %1315 = vmatpush1.bf16.msra.mxu0 0
        %1316 = vmatprep.subr.bf16.mxu0 0
        %1317 = vmatpush1.bf16.msra.mxu0 0
        %1318 = vmatprep.mubr.bf16.mxu0 0
        %1319 = vmatmul.mubr.bf16.gmra.mrb[0].mxu0 %v1285
        %v1320 = vpop.f32.mrb[0].mxu0
        %v1321 = vadd.f32 0.0, %v1320
        %v1322 = vpop.f32.mrb[0].mxu0
        %v1323 = vadd.f32 0.0, %v1322
        %v1324 = vpop.f32.mrb[0].mxu0
        %v1325 = vadd.f32 0.0, %v1324
        %v1326 = vpop.f32.mrb[0].mxu0
        %v1327 = vadd.f32 0.0, %v1326
        %1328 = vdwg.mxu0
        %1329 = vmatprep.subr.bf16.mxu0 0
        %1330 = vmatpush1.bf16.msra.mxu0 %v960
        %1331 = vmatprep.subr.bf16.mxu0 0
        %1332 = vmatpush1.bf16.msra.mxu0 %v963
        %1333 = vmatprep.subr.bf16.mxu0 0
        %1334 = vmatpush1.bf16.msra.mxu0 %v966
        %1335 = vmatprep.subr.bf16.mxu0 0
        %1336 = vmatpush1.bf16.msra.mxu0 %v969
        %1337 = vmatprep.subr.bf16.mxu0 0
        %1338 = vmatpush1.bf16.msra.mxu0 %v972
        %1339 = vmatprep.subr.bf16.mxu0 0
        %1340 = vmatpush1.bf16.msra.mxu0 %v975
        %1341 = vmatprep.subr.bf16.mxu0 0
        %1342 = vmatpush1.bf16.msra.mxu0 %v978
        %1343 = vmatprep.subr.bf16.mxu0 0
        %1344 = vmatpush1.bf16.msra.mxu0 %v981
        %1345 = vmatprep.subr.bf16.mxu0 0
        %1346 = vmatpush1.bf16.msra.mxu0 0
        %1347 = vmatprep.subr.bf16.mxu0 0
        %1348 = vmatpush1.bf16.msra.mxu0 0
        %1349 = vmatprep.subr.bf16.mxu0 0
        %1350 = vmatpush1.bf16.msra.mxu0 0
        %1351 = vmatprep.subr.bf16.mxu0 0
        %1352 = vmatpush1.bf16.msra.mxu0 0
        %1353 = vmatprep.subr.bf16.mxu0 0
        %1354 = vmatpush1.bf16.msra.mxu0 0
        %1355 = vmatprep.subr.bf16.mxu0 0
        %1356 = vmatpush1.bf16.msra.mxu0 0
        %1357 = vmatprep.subr.bf16.mxu0 0
        %1358 = vmatpush1.bf16.msra.mxu0 0
        %1359 = vmatprep.subr.bf16.mxu0 0
        %1360 = vmatpush1.bf16.msra.mxu0 0
        %1361 = vmatprep.mubr.bf16.mxu0 0
        %1362 = vmatmul.mubr.bf16.gmra.mrb[0].mxu0 %v1285
        %v1363 = vpop.f32.mrb[0].mxu0
        %v1364 = vadd.f32 0.0, %v1363
        %v1365 = vpop.f32.mrb[0].mxu0
        %v1366 = vpop.f32.mrb[0].mxu0
        %v1367 = vadd.f32 0.0, %v1366
        %v1368 = vpop.f32.mrb[0].mxu0
        %1369 = vdwg.mxu0
        %v1370 = vadd.f32 %v1279, %v1321
        %v1371 = vadd.f32 %v1282, %v1325
        %v1372 = vmul.f32 %v1370, 0.5
        %v1373 = vmul.f32 %v1371, 0.5
        %v1374 = vtanh.pop %v1372
        %v1375 = vtanh.pop %v1373
        %v1376 = vmul.f32 %v1374, 0.5
        %v1377 = vmul.f32 %v1375, 0.5
        %v1378 = vadd.f32 %v1376, 0.5
        %v1379 = vadd.f32 %v1377, 0.5
        %v1380 = vadd.f32 %v1280, %v1323
        %v1381 = vadd.f32 %v1283, %v1327
        %v1382 = vmul.f32 %v1380, 0.5
        %v1383 = vmul.f32 %v1381, 0.5
        %v1384 = vtanh.pop %v1382
        %v1385 = vtanh.pop %v1383
        %v1386 = vmul.f32 %v1384, 0.5
        %v1387 = vmul.f32 %v1385, 0.5
        %v1388 = vadd.f32 %v1386, 0.5
        %v1389 = vadd.f32 %v1387, 0.5
        %v1390 = vadd.f32 %v1364, %v1114
        %v1391 = vadd.f32 %v1367, %v1114
        %v1392 = vmul.f32 %v1378, %v1390
        %v1393 = vmul.f32 %v1379, %v1391
        %v1394 = vadd.f32 %v1281, %v1392
        %v1395 = vadd.f32 %v1284, %v1393
        %v1396 = vtanh.pop %v1394
        %v1397 = vtanh.pop %v1395
        %v1398 = vsub.f32 %v1137, %v1396
        %v1399 = vsub.f32 %v1138, %v1397
        %v1400 = vmul.f32 %v1388, %v1398
        %v1401 = vmul.f32 %v1389, %v1399
        %v1402 = vadd.f32 %v1396, %v1400
        %v1403 = vadd.f32 %v1397, %v1401
        %s1404 = sadd.s32 %s1131, 1
        %p1405 = scmp.lt.s32.totalorder %s1404, 8
        %s1406 = scalar_select %p1405, 1, 0
        %v1407 = vstv %s1406
        %vm1408 = vcmp.eq.s32.totalorder %v1407, 1
        %v1409 = vsel %vm1408, %v1402, %v1137
        %v1410 = vsel %vm1408, %v1403, %v1138
        %s1411 = scalar_lea.vmem %s501, 16 [#allocation14]
        %1412 = vst [vmem:[%s1411] sm:$0xff] %v1409
        %1413 = vst [vmem:[%s1411 + $0x8] sm:$0xff] %v1410
        %s1414 = scalar_lea.vmem %s431, 96 [#allocation4]
        %v1415 = vld [vmem:[%s1414] sm:$0xff]
        %v1416 = vld [vmem:[%s1414 + $0x8] sm:$0xff]
        %v1417 = vld [vmem:[%s1414 + $0x10] sm:$0xff]
        %v1418 = vld [vmem:[%s1414 + $0x18] sm:$0xff]
        %v1419 = vld [vmem:[%s1414 + $0x20] sm:$0xff]
        %v1420 = vld [vmem:[%s1414 + $0x28] sm:$0xff]
        %v1421 = vpack.c.bf16 %v1274, %v1273
        %1422 = vmatprep.subr.bf16.mxu0 %v690
        %1423 = vmatpush1.bf16.msra.mxu0 %v689
        %1424 = vmatprep.subr.bf16.mxu0 %v693
        %1425 = vmatpush1.bf16.msra.mxu0 %v692
        %1426 = vmatprep.subr.bf16.mxu0 %v696
        %1427 = vmatpush1.bf16.msra.mxu0 %v695
        %1428 = vmatprep.subr.bf16.mxu0 %v699
        %1429 = vmatpush1.bf16.msra.mxu0 %v698
        %1430 = vmatprep.subr.bf16.mxu0 %v702
        %1431 = vmatpush1.bf16.msra.mxu0 %v701
        %1432 = vmatprep.subr.bf16.mxu0 %v705
        %1433 = vmatpush1.bf16.msra.mxu0 %v704
        %1434 = vmatprep.subr.bf16.mxu0 %v708
        %1435 = vmatpush1.bf16.msra.mxu0 %v707
        %1436 = vmatprep.subr.bf16.mxu0 %v711
        %1437 = vmatpush1.bf16.msra.mxu0 %v710
        %1438 = vmatprep.subr.bf16.mxu0 0
        %1439 = vmatpush1.bf16.msra.mxu0 0
        %1440 = vmatprep.subr.bf16.mxu0 0
        %1441 = vmatpush1.bf16.msra.mxu0 0
        %1442 = vmatprep.subr.bf16.mxu0 0
        %1443 = vmatpush1.bf16.msra.mxu0 0
        %1444 = vmatprep.subr.bf16.mxu0 0
        %1445 = vmatpush1.bf16.msra.mxu0 0
        %1446 = vmatprep.subr.bf16.mxu0 0
        %1447 = vmatpush1.bf16.msra.mxu0 0
        %1448 = vmatprep.subr.bf16.mxu0 0
        %1449 = vmatpush1.bf16.msra.mxu0 0
        %1450 = vmatprep.subr.bf16.mxu0 0
        %1451 = vmatpush1.bf16.msra.mxu0 0
        %1452 = vmatprep.subr.bf16.mxu0 0
        %1453 = vmatpush1.bf16.msra.mxu0 0
        %1454 = vmatprep.mubr.bf16.mxu0 0
        %1455 = vmatmul.mubr.bf16.gmra.mrb[0].mxu0 %v1421
        %v1456 = vpop.f32.mrb[0].mxu0
        %v1457 = vadd.f32 0.0, %v1456
        %v1458 = vpop.f32.mrb[0].mxu0
        %v1459 = vadd.f32 0.0, %v1458
        %v1460 = vpop.f32.mrb[0].mxu0
        %v1461 = vadd.f32 0.0, %v1460
        %v1462 = vpop.f32.mrb[0].mxu0
        %v1463 = vadd.f32 0.0, %v1462
        %1464 = vdwg.mxu0
        %1465 = vmatprep.subr.bf16.mxu0 0
        %1466 = vmatpush1.bf16.msra.mxu0 %v691
        %1467 = vmatprep.subr.bf16.mxu0 0
        %1468 = vmatpush1.bf16.msra.mxu0 %v694
        %1469 = vmatprep.subr.bf16.mxu0 0
        %1470 = vmatpush1.bf16.msra.mxu0 %v697
        %1471 = vmatprep.subr.bf16.mxu0 0
        %1472 = vmatpush1.bf16.msra.mxu0 %v700
        %1473 = vmatprep.subr.bf16.mxu0 0
        %1474 = vmatpush1.bf16.msra.mxu0 %v703
        %1475 = vmatprep.subr.bf16.mxu0 0
        %1476 = vmatpush1.bf16.msra.mxu0 %v706
        %1477 = vmatprep.subr.bf16.mxu0 0
        %1478 = vmatpush1.bf16.msra.mxu0 %v709
        %1479 = vmatprep.subr.bf16.mxu0 0
        %1480 = vmatpush1.bf16.msra.mxu0 %v712
        %1481 = vmatprep.subr.bf16.mxu0 0
        %1482 = vmatpush1.bf16.msra.mxu0 0
        %1483 = vmatprep.subr.bf16.mxu0 0
        %1484 = vmatpush1.bf16.msra.mxu0 0
        %1485 = vmatprep.subr.bf16.mxu0 0
        %1486 = vmatpush1.bf16.msra.mxu0 0
        %1487 = vmatprep.subr.bf16.mxu0 0
        %1488 = vmatpush1.bf16.msra.mxu0 0
        %1489 = vmatprep.subr.bf16.mxu0 0
        %1490 = vmatpush1.bf16.msra.mxu0 0
        %1491 = vmatprep.subr.bf16.mxu0 0
        %1492 = vmatpush1.bf16.msra.mxu0 0
        %1493 = vmatprep.subr.bf16.mxu0 0
        %1494 = vmatpush1.bf16.msra.mxu0 0
        %1495 = vmatprep.subr.bf16.mxu0 0
        %1496 = vmatpush1.bf16.msra.mxu0 0
        %1497 = vmatprep.mubr.bf16.mxu0 0
        %1498 = vmatmul.mubr.bf16.gmra.mrb[0].mxu0 %v1421
        %v1499 = vpop.f32.mrb[0].mxu0
        %v1500 = vadd.f32 0.0, %v1499
        %v1501 = vpop.f32.mrb[0].mxu0
        %v1502 = vpop.f32.mrb[0].mxu0
        %v1503 = vadd.f32 0.0, %v1502
        %v1504 = vpop.f32.mrb[0].mxu0
        %1505 = vdwg.mxu0
        %v1506 = vadd.f32 %v1415, %v1457
        %v1507 = vadd.f32 %v1418, %v1461
        %v1508 = vmul.f32 %v1506, 0.5
        %v1509 = vmul.f32 %v1507, 0.5
        %v1510 = vtanh.pop %v1508
        %v1511 = vtanh.pop %v1509
        %v1512 = vmul.f32 %v1510, 0.5
        %v1513 = vmul.f32 %v1511, 0.5
        %v1514 = vadd.f32 %v1512, 0.5
        %v1515 = vadd.f32 %v1513, 0.5
        %v1516 = vadd.f32 %v1416, %v1459
        %v1517 = vadd.f32 %v1419, %v1463
        %v1518 = vmul.f32 %v1516, 0.5
        %v1519 = vmul.f32 %v1517, 0.5
        %v1520 = vtanh.pop %v1518
        %v1521 = vtanh.pop %v1519
        %v1522 = vmul.f32 %v1520, 0.5
        %v1523 = vmul.f32 %v1521, 0.5
        %v1524 = vadd.f32 %v1522, 0.5
        %v1525 = vadd.f32 %v1523, 0.5
        %v1526 = vadd.f32 %v1500, %v845
        %v1527 = vadd.f32 %v1503, %v845
        %v1528 = vmul.f32 %v1514, %v1526
        %v1529 = vmul.f32 %v1515, %v1527
        %v1530 = vadd.f32 %v1417, %v1528
        %v1531 = vadd.f32 %v1420, %v1529
        %v1532 = vtanh.pop %v1530
        %v1533 = vtanh.pop %v1531
        %v1534 = vsub.f32 %v1273, %v1532
        %v1535 = vsub.f32 %v1274, %v1533
        %v1536 = vmul.f32 %v1524, %v1534
        %v1537 = vmul.f32 %v1525, %v1535
        %v1538 = vadd.f32 %v1532, %v1536
        %v1539 = vadd.f32 %v1533, %v1537
        %s1540 = sadd.s32 %s861, 2
        %p1541 = scmp.lt.s32.totalorder %s1540, 8
        %s1542 = scalar_select %p1541, 1, 0
        %v1543 = vstv %s1542
        %vm1544 = vcmp.eq.s32.totalorder %v1543, 1
        %v1545 = vsel %vm1544, %v1538, %v1273
        %v1546 = vsel %vm1544, %v1539, %v1274
        %s1547 = scalar_lea.vmem %s494, 32 [#allocation13]
        %1548 = vst [vmem:[%s1547] sm:$0xff] %v1545
        %1549 = vst [vmem:[%s1547 + $0x8] sm:$0xff] %v1546
        %v1550 = vld [vmem:[%s448] sm:$0xff]
        %v1551 = vld [vmem:[%s448 + $0x8] sm:$0xff]
        %v1552 = vld [vmem:[%s448 + $0x10] sm:$0xff]
        %v1553 = vld [vmem:[%s448 + $0x18] sm:$0xff]
        %v1554 = vld [vmem:[%s448 + $0x20] sm:$0xff]
        %v1555 = vld [vmem:[%s448 + $0x28] sm:$0xff]
        %v1556 = vpack.c.bf16 %v1410, %v1409
        %1557 = vmatprep.subr.bf16.mxu0 %v959
        %1558 = vmatpush1.bf16.msra.mxu0 %v958
        %1559 = vmatprep.subr.bf16.mxu0 %v962
        %1560 = vmatpush1.bf16.msra.mxu0 %v961
        %1561 = vmatprep.subr.bf16.mxu0 %v965
        %1562 = vmatpush1.bf16.msra.mxu0 %v964
        %1563 = vmatprep.subr.bf16.mxu0 %v968
        %1564 = vmatpush1.bf16.msra.mxu0 %v967
        %1565 = vmatprep.subr.bf16.mxu0 %v971
        %1566 = vmatpush1.bf16.msra.mxu0 %v970
        %1567 = vmatprep.subr.bf16.mxu0 %v974
        %1568 = vmatpush1.bf16.msra.mxu0 %v973
        %1569 = vmatprep.subr.bf16.mxu0 %v977
        %1570 = vmatpush1.bf16.msra.mxu0 %v976
        %1571 = vmatprep.subr.bf16.mxu0 %v980
        %1572 = vmatpush1.bf16.msra.mxu0 %v979
        %1573 = vmatprep.subr.bf16.mxu0 0
        %1574 = vmatpush1.bf16.msra.mxu0 0
        %1575 = vmatprep.subr.bf16.mxu0 0
        %1576 = vmatpush1.bf16.msra.mxu0 0
        %1577 = vmatprep.subr.bf16.mxu0 0
        %1578 = vmatpush1.bf16.msra.mxu0 0
        %1579 = vmatprep.subr.bf16.mxu0 0
        %1580 = vmatpush1.bf16.msra.mxu0 0
        %1581 = vmatprep.subr.bf16.mxu0 0
        %1582 = vmatpush1.bf16.msra.mxu0 0
        %1583 = vmatprep.subr.bf16.mxu0 0
        %1584 = vmatpush1.bf16.msra.mxu0 0
        %1585 = vmatprep.subr.bf16.mxu0 0
        %1586 = vmatpush1.bf16.msra.mxu0 0
        %1587 = vmatprep.subr.bf16.mxu0 0
        %1588 = vmatpush1.bf16.msra.mxu0 0
        %1589 = vmatprep.mubr.bf16.mxu0 0
        %1590 = vmatmul.mubr.bf16.gmra.mrb[0].mxu0 %v1556
        %v1591 = vpop.f32.mrb[0].mxu0
        %v1592 = vadd.f32 0.0, %v1591
        %v1593 = vpop.f32.mrb[0].mxu0
        %v1594 = vadd.f32 0.0, %v1593
        %v1595 = vpop.f32.mrb[0].mxu0
        %v1596 = vadd.f32 0.0, %v1595
        %v1597 = vpop.f32.mrb[0].mxu0
        %v1598 = vadd.f32 0.0, %v1597
        %1599 = vdwg.mxu0
        %1600 = vmatprep.subr.bf16.mxu0 0
        %1601 = vmatpush1.bf16.msra.mxu0 %v960
        %1602 = vmatprep.subr.bf16.mxu0 0
        %1603 = vmatpush1.bf16.msra.mxu0 %v963
        %1604 = vmatprep.subr.bf16.mxu0 0
        %1605 = vmatpush1.bf16.msra.mxu0 %v966
        %1606 = vmatprep.subr.bf16.mxu0 0
        %1607 = vmatpush1.bf16.msra.mxu0 %v969
        %1608 = vmatprep.subr.bf16.mxu0 0
        %1609 = vmatpush1.bf16.msra.mxu0 %v972
        %1610 = vmatprep.subr.bf16.mxu0 0
        %1611 = vmatpush1.bf16.msra.mxu0 %v975
        %1612 = vmatprep.subr.bf16.mxu0 0
        %1613 = vmatpush1.bf16.msra.mxu0 %v978
        %1614 = vmatprep.subr.bf16.mxu0 0
        %1615 = vmatpush1.bf16.msra.mxu0 %v981
        %1616 = vmatprep.subr.bf16.mxu0 0
        %1617 = vmatpush1.bf16.msra.mxu0 0
        %1618 = vmatprep.subr.bf16.mxu0 0
        %1619 = vmatpush1.bf16.msra.mxu0 0
        %1620 = vmatprep.subr.bf16.mxu0 0
        %1621 = vmatpush1.bf16.msra.mxu0 0
        %1622 = vmatprep.subr.bf16.mxu0 0
        %1623 = vmatpush1.bf16.msra.mxu0 0
        %1624 = vmatprep.subr.bf16.mxu0 0
        %1625 = vmatpush1.bf16.msra.mxu0 0
        %1626 = vmatprep.subr.bf16.mxu0 0
        %1627 = vmatpush1.bf16.msra.mxu0 0
        %1628 = vmatprep.subr.bf16.mxu0 0
        %1629 = vmatpush1.bf16.msra.mxu0 0
        %1630 = vmatprep.subr.bf16.mxu0 0
        %1631 = vmatpush1.bf16.msra.mxu0 0
        %1632 = vmatprep.mubr.bf16.mxu0 0
        %1633 = vmatmul.mubr.bf16.gmra.mrb[0].mxu0 %v1556
        %v1634 = vpop.f32.mrb[0].mxu0
        %v1635 = vadd.f32 0.0, %v1634
        %v1636 = vpop.f32.mrb[0].mxu0
        %v1637 = vpop.f32.mrb[0].mxu0
        %v1638 = vadd.f32 0.0, %v1637
        %v1639 = vpop.f32.mrb[0].mxu0
        %1640 = vdwg.mxu0
        %v1641 = vadd.f32 %v1550, %v1592
        %v1642 = vadd.f32 %v1553, %v1596
        %v1643 = vmul.f32 %v1641, 0.5
        %v1644 = vmul.f32 %v1642, 0.5
        %v1645 = vtanh.pop %v1643
        %v1646 = vtanh.pop %v1644
        %v1647 = vmul.f32 %v1645, 0.5
        %v1648 = vmul.f32 %v1646, 0.5
        %v1649 = vadd.f32 %v1647, 0.5
        %v1650 = vadd.f32 %v1648, 0.5
        %v1651 = vadd.f32 %v1551, %v1594
        %v1652 = vadd.f32 %v1554, %v1598
        %v1653 = vmul.f32 %v1651, 0.5
        %v1654 = vmul.f32 %v1652, 0.5
        %v1655 = vtanh.pop %v1653
        %v1656 = vtanh.pop %v1654
        %v1657 = vmul.f32 %v1655, 0.5
        %v1658 = vmul.f32 %v1656, 0.5
        %v1659 = vadd.f32 %v1657, 0.5
        %v1660 = vadd.f32 %v1658, 0.5
        %v1661 = vadd.f32 %v1635, %v1114
        %v1662 = vadd.f32 %v1638, %v1114
        %v1663 = vmul.f32 %v1649, %v1661
        %v1664 = vmul.f32 %v1650, %v1662
        %v1665 = vadd.f32 %v1552, %v1663
        %v1666 = vadd.f32 %v1555, %v1664
        %v1667 = vtanh.pop %v1665
        %v1668 = vtanh.pop %v1666
        %v1669 = vsub.f32 %v1409, %v1667
        %v1670 = vsub.f32 %v1410, %v1668
        %v1671 = vmul.f32 %v1659, %v1669
        %v1672 = vmul.f32 %v1660, %v1670
        %v1673 = vadd.f32 %v1667, %v1671
        %v1674 = vadd.f32 %v1668, %v1672
        %p1675 = scmp.lt.s32.totalorder %s1131, 8
        %s1676 = scalar_select %p1675, 1, 0
        %v1677 = vstv %s1676
        %vm1678 = vcmp.eq.s32.totalorder %v1677, 1
        %v1679 = vsel %vm1678, %v1673, %v1409
        %v1680 = vsel %vm1678, %v1674, %v1410
        %1681 = vst [vmem:[%s501] sm:$0xff] %v1679
        %1682 = vst [vmem:[%s501 + $0x8] sm:$0xff] %v1680
        %1683 = vst [vmem:[#allocation2] sm:$0xff] %v1545
        %1684 = vst [vmem:[#allocation2 + $0x8] sm:$0xff] %v1546
        %1685 = vst [vmem:[#allocation3] sm:$0xff] %v1679
        %1686 = vst [vmem:[#allocation3 + $0x8] sm:$0xff] %v1680
        %s1687 = sand.u32 %s250, 1
        %s1688 = scalar_lea.sflag [#allocation6], %s1687
        %s1689 = sand.u32 %s250, 1
        %s1690 = smul.addr %s1689, 48
        %s1691 = scalar_lea.vmem [#allocation13], %s1690
        %s1692 = sand.u32 %s280, 1
        %s1693 = scalar_lea.sflag [#allocation15], %s1692
        %s1694 = sand.u32 %s280, 1
        %s1695 = smul.addr %s1694, 48
        %s1696 = scalar_lea.vmem [#allocation14], %s1695
        // Predicated region
        $region77: #{tpu_custom_call.1} parent=51 // pred_check
          %p1697 = pneg %p260
        $region78: #{tpu_custom_call.1} parent=51 // pred_check_branch
          %1699 = sbr.rel (%p1697) target = $region80
        $region79: #{tpu_custom_call.1} parent=51 // pred_region
          %s1700 = smul.u32 3, %s39
          %s1701 = smul.u32 2, %s38
          %s1703 = ssub.s32 768, 768
          %1704 = vsyncadd %s1688, %s1703
          %s1705 = smul.addr %s1700, 2
          %s1706 = sadd.s32 %s1701, %s1705
          %s1707 = smul.addr %s1706, 128
          %s1708 = scalar_lea.hbm %s8, %s1707
          %s1709 = sshll.u32 %s1691, 4
          %s1710 = int_to_ptr.vmem [resolvable:$true] %s1709
          %1715 = dma.vmem_to_hbm [thread:$0]  %s1710, 768, %s1708, %s1688, 128, 128, 8
        $region80: #{tpu_custom_call.1} parent=51 // pred_fallthru
          _
        // Predicated region
        $region81: #{tpu_custom_call.1} parent=51 // pred_check
          %p1716 = pneg %p290
        $region82: #{tpu_custom_call.1} parent=51 // pred_check_branch
          %1718 = sbr.rel (%p1716) target = $region84
        $region83: #{tpu_custom_call.1} parent=51 // pred_region
          %s1719 = ssub.s32 2, %s39
          %s1720 = smul.u32 3, %s1719
          %s1721 = smul.u32 2, %s38
          %s1723 = ssub.s32 768, 768
          %1724 = vsyncadd %s1693, %s1723
          %s1725 = smul.addr %s1720, 2
          %s1726 = sadd.s32 %s1721, %s1725
          %s1727 = smul.addr %s1726, 128
          %s1728 = scalar_lea.hbm %s9, %s1727
          %s1729 = sshll.u32 %s1696, 4
          %s1730 = int_to_ptr.vmem [resolvable:$true] %s1729
          %1735 = dma.vmem_to_hbm [thread:$0]  %s1730, 768, %s1728, %s1693, 128, 128, 8
        $region84: #{tpu_custom_call.1} parent=51 // pred_fallthru
          _
      $region52: #{tpu_custom_call.1} parent=5 // pred_fallthru
        _
      %p1736 = scmp.le.s32.totalorder 2, %s29
      // Predicated region
      $region85: #{tpu_custom_call.1} parent=5 // pred_check
        %p1737 = pneg %p1736
      $region86: #{tpu_custom_call.1} parent=5 // pred_check_branch
        %1739 = sbr.rel (%p1737) target = $region88
      $region87: #{tpu_custom_call.1} parent=5 // pred_region
        %s1740 = ssub.s32 %s29, 2
        // Predicated region
        $region89: #{tpu_custom_call.1} parent=87 // pred_check
          %p1741 = pneg %p266
        $region90: #{tpu_custom_call.1} parent=87 // pred_check_branch
          %1743 = sbr.rel (%p1741) target = $region92
        $region91: #{tpu_custom_call.1} parent=87 // pred_region
          %s1744 = sand.u32 %s251, 1
          %s1745 = scalar_lea.sflag [#allocation6], %s1744
          %s1746 = sand.u32 %s251, 1
          %s1747 = smul.addr %s1746, 48
          %s1748 = scalar_lea.vmem [#allocation13], %s1747
          %1749 = dma.done %s1745, 768
        $region92: #{tpu_custom_call.1} parent=87 // pred_fallthru
          _
        // Predicated region
        $region93: #{tpu_custom_call.1} parent=87 // pred_check
          %p1750 = pneg %p296
        $region94: #{tpu_custom_call.1} parent=87 // pred_check_branch
          %1752 = sbr.rel (%p1750) target = $region96
        $region95: #{tpu_custom_call.1} parent=87 // pred_region
          %s1753 = sand.u32 %s281, 1
          %s1754 = scalar_lea.sflag [#allocation15], %s1753
          %s1755 = sand.u32 %s281, 1
          %s1756 = smul.addr %s1755, 48
          %s1757 = scalar_lea.vmem [#allocation14], %s1756
          %1758 = dma.done %s1754, 768
        $region96: #{tpu_custom_call.1} parent=87 // pred_fallthru
          _
      $region88: #{tpu_custom_call.1} parent=5 // pred_fallthru
        _
    $region6: #{tpu_custom_call.1} parent=1 // loop_footer
      %s33 = sadd.s32 1, %s29
    $region7: #{tpu_custom_call.1} parent=1 // loop_footer_branch
      %28 = sbr.rel target = $region3
    $region8: #{tpu_custom_call.1} parent=1 // loop_exit
      _
    %1759 = vsyncpa [#allocation5], 1
    %s1760 = scalar_lea.sflag [#allocation5], 1
    %1761 = vsyncpa %s1760, 1
    %1762 = vsyncpa [#allocation8], 1
    %1763 = vsyncpa [#allocation11], 1
    %s1764 = scalar_lea.sflag [#allocation11], 1
    %1765 = vsyncpa %s1764, 1
    %1766 = vsyncpa [#allocation6], 1
    %s1767 = scalar_lea.sflag [#allocation6], 1
    %1768 = vsyncpa %s1767, 1
    %1769 = vsyncpa [#allocation15], 1
    %s1770 = scalar_lea.sflag [#allocation15], 1
    %1771 = vsyncpa %s1770, 1

</llo_original>
